<compile_context>
chip_gen: v5e
topology: v5e:2x2
jax: 0.10.0
libtpu: 0.0.40
codegen_flags: <defaults>
</compile_context>

<pallas_src>
import math
import numpy as np
import jax
import jax.numpy as jnp
from jax.experimental import pallas as pl
from jax.experimental.pallas import tpu as pltpu

# Small, shape-consistent problem sizes
STATE_DIM = 4          # state_dim (also number of ctx Linear layers)
EMBED_DIM = 32         # embed_dim
NUM_HEADS = 4          # num_heads
HEAD_DIM = EMBED_DIM // NUM_HEADS
BATCH = 2
SEQ = 8                # query sequence length
L_K = SEQ * STATE_DIM  # key/value length after torch.cat(dim=1)
OUT_PAD = 128          # lane-dense output slab width


def _attn_kernel(x_ref, wA_ref, bA_ref, wq_ref, bq_ref, wkv_ref, bkv_ref,
                 wout_ref, bout_ref, out_ref):
    """Fused forward for the whole batch in a single grid step."""
    x2 = x_ref[...]                                            # (B*S, D)

    # ---- fused [ctx_0 .. ctx_3 | project] projection: one MXU op + one bias add ----
    y = jnp.dot(x2, wA_ref[...], preferred_element_type=jnp.float32) + bA_ref[...]
    y = jnp.maximum(y, 0.0)                                    # ReLU for both branches

    kstack = y[:, :STATE_DIM * EMBED_DIM]                      # (B*S, 4E) lane-dense
    q2 = y[:, STATE_DIM * EMBED_DIM:]                          # (B*S, E)

    # ---- reassemble k = cat_i ctx_i(x) along the sequence axis -> (B, L_K, E) ----
    k = jnp.concatenate(
        [kstack[:, i * EMBED_DIM:(i + 1) * EMBED_DIM].reshape(BATCH, SEQ, EMBED_DIM)
         for i in range(STATE_DIM)], axis=1)

    # ---- L2 normalize over the concatenated sequence axis (F.normalize dim=1) ----
    ssq = jnp.sum(k * k, axis=1, keepdims=True)                # (B, 1, E)
    inv_norm = jax.lax.rsqrt(jnp.maximum(ssq, 1e-24))          # == 1 / max(||k||_2, 1e-12)
    k = k * inv_norm                                           # v = k

    # ---- MHA in-projections (pre-transposed weights; K/V fused since v == k) ----
    qp = (jnp.dot(q2, wq_ref[...], preferred_element_type=jnp.float32)
          + bq_ref[...]).reshape(BATCH, SEQ, EMBED_DIM)        # (B, S, E)
    k2 = k.reshape(BATCH * L_K, EMBED_DIM)                     # (B*L_K, E)
    kv = jnp.dot(k2, wkv_ref[...], preferred_element_type=jnp.float32) + bkv_ref[...]
    kp = kv[:, :EMBED_DIM].reshape(BATCH, L_K, EMBED_DIM)      # (B, L_K, E)
    vp = kv[:, EMBED_DIM:].reshape(BATCH, L_K, EMBED_DIM)      # (B, L_K, E)

    # ---- scores for all heads, single softmax (heads stacked on the leading axis) ----
    scale = 1.0 / math.sqrt(HEAD_DIM)
    s_heads = []
    for h in range(NUM_HEADS):                                 # static, fully unrolled
        lo = h * HEAD_DIM
        s_heads.append(jnp.einsum(
            'bqd,bkd->bqk',
            qp[:, :, lo:lo + HEAD_DIM], kp[:, :, lo:lo + HEAD_DIM],
            preferred_element_type=jnp.float32))
    s = jnp.concatenate(s_heads, axis=0) * scale               # (H*B, S, L_K)
    s = s - jnp.max(s, axis=-1, keepdims=True)
    p = jnp.exp(s)
    p = p * pl.reciprocal(jnp.sum(p, axis=-1, keepdims=True), approx=False)

    # ---- weighted values per head + head-averaged attention weights ----
    o_heads = []
    w_sum = None
    for h in range(NUM_HEADS):
        ph = p[h * BATCH:(h + 1) * BATCH]                      # (B, S, L_K)
        w_sum = ph if w_sum is None else w_sum + ph
        lo = h * HEAD_DIM
        o_heads.append(jnp.einsum(
            'bqk,bkd->bqd', ph, vp[:, :, lo:lo + HEAD_DIM],
            preferred_element_type=jnp.float32))
    attnw = w_sum * (1.0 / NUM_HEADS)                          # (B, S, L_K)
    o = jnp.concatenate(o_heads, axis=-1).reshape(BATCH * SEQ, EMBED_DIM)

    out = jnp.dot(o, wout_ref[...], preferred_element_type=jnp.float32) + bout_ref[...]

    # ---- single lane-dense store: [out | attn weights | zero pad] -> (B*S, 128) ----
    pad = jnp.zeros((BATCH * SEQ, OUT_PAD - EMBED_DIM - L_K), jnp.float32)
    out_ref[...] = jnp.concatenate(
        [out, attnw.reshape(BATCH * SEQ, L_K), pad], axis=-1)


def attn_forward(x, params):
    wp, bp, wc, bc, win, binb, wout, bout = params
    B, S, D = x.shape

    # ---- host-side weight packing / pre-transpose (layout plumbing only) ----
    wA = jnp.concatenate([wc[i].T for i in range(STATE_DIM)] + [wp.T], axis=1)       # (D, 5E)
    bA = jnp.concatenate([bc[i][None, :] for i in range(STATE_DIM)] + [bp], axis=1)  # (1, 5E)
    wq_t = win[:EMBED_DIM].T                                                         # (E, E)
    wkv_t = jnp.concatenate(
        [win[EMBED_DIM:2 * EMBED_DIM].T, win[2 * EMBED_DIM:].T], axis=1)             # (E, 2E)
    bq = binb[0:1]                                                                   # (1, E)
    bkv = jnp.concatenate([binb[1:2], binb[2:3]], axis=1)                            # (1, 2E)
    wout_t = wout.T                                                                  # (E, E)
    x2 = x.reshape(B * S, D)

    def full_spec(arr):
        nd = arr.ndim
        return pl.BlockSpec(arr.shape, lambda i, _nd=nd: (0,) * _nd)

    operands = (x2, wA, bA, wq_t, bq, wkv_t, bkv, wout_t, bout)

    slab = pl.pallas_call(
        _attn_kernel,
        out_shape=jax.ShapeDtypeStruct((B * S, OUT_PAD), jnp.float32),
        grid_spec=pltpu.PrefetchScalarGridSpec(
            num_scalar_prefetch=0,
            grid=(1,),                                   # whole batch, single grid step
            in_specs=[full_spec(a) for a in operands],
            out_specs=pl.BlockSpec((B * S, OUT_PAD), lambda i: (0, 0)),
        ),
        compiler_params=pltpu.CompilerParams(dimension_semantics=("arbitrary",)),
    )(*operands)

    out = slab[:, :EMBED_DIM].reshape(B, S, EMBED_DIM)
    attnw = slab[:, EMBED_DIM:EMBED_DIM + L_K].reshape(B, S, L_K)
    return out, attnw


def ref_forward(x, params):
    """Pure-JAX reference (mirrors PyTorch forward in eval mode)."""
    wp, bp, wc, bc, win, binb, wout, bout = params
    B, S, _ = x.shape
    q = jax.nn.relu(jnp.einsum('bsd,ed->bse', x, wp) + bp[0])
    ks = [jnp.einsum('bsd,ed->bse', x, wc[i]) + bc[i] for i in range(STATE_DIM)]
    k = jax.nn.relu(jnp.concatenate(ks, axis=1))
    norm = jnp.sqrt(jnp.sum(k * k, axis=1, keepdims=True))
    k = k / jnp.maximum(norm, 1e-12)
    v = k
    wq, wk, wv = win[:EMBED_DIM], win[EMBED_DIM:2 * EMBED_DIM], win[2 * EMBED_DIM:]
    qp = jnp.einsum('bse,fe->bsf', q, wq) + binb[0]
    kp = jnp.einsum('bse,fe->bsf', k, wk) + binb[1]
    vp = jnp.einsum('bse,fe->bsf', v, wv) + binb[2]
    qh = qp.reshape(B, S, NUM_HEADS, HEAD_DIM).transpose(0, 2, 1, 3)
    kh = kp.reshape(B, L_K, NUM_HEADS, HEAD_DIM).transpose(0, 2, 1, 3)
    vh = vp.reshape(B, L_K, NUM_HEADS, HEAD_DIM).transpose(0, 2, 1, 3)
    s = jnp.einsum('bhqd,bhkd->bhqk', qh, kh) / math.sqrt(HEAD_DIM)
    p = jax.nn.softmax(s, axis=-1)
    o = jnp.einsum('bhqk,bhkd->bhqd', p, vh).transpose(0, 2, 1, 3).reshape(B, S, EMBED_DIM)
    out = jnp.einsum('bse,fe->bsf', o, wout) + bout[0]
    return out, p.mean(axis=1)


def init_params(key):
    ks = jax.random.split(key, 8)

    def lin(k, fan_in, shape):
        bound = 1.0 / math.sqrt(fan_in)
        return jax.random.uniform(k, shape, jnp.float32, -bound, bound)

    wp = lin(ks[0], STATE_DIM, (EMBED_DIM, STATE_DIM))
    bp = lin(ks[1], STATE_DIM, (1, EMBED_DIM))
    wc = lin(ks[2], STATE_DIM, (STATE_DIM, EMBED_DIM, STATE_DIM))
    bc = lin(ks[3], STATE_DIM, (STATE_DIM, EMBED_DIM))
    win = lin(ks[4], EMBED_DIM, (3 * EMBED_DIM, EMBED_DIM))
    binb = jnp.zeros((3, EMBED_DIM), jnp.float32)       # PyTorch MHA in_proj_bias init = 0
    wout = lin(ks[5], EMBED_DIM, (EMBED_DIM, EMBED_DIM))
    bout = jnp.zeros((1, EMBED_DIM), jnp.float32)       # PyTorch MHA out_proj bias init = 0
    return (wp, bp, wc, bc, win, binb, wout, bout)


if __name__ == "__main__":
    key = jax.random.PRNGKey(0)
    pkey, xkey = jax.random.split(key)
    params = init_params(pkey)
    x = jax.random.normal(xkey, (BATCH, SEQ, STATE_DIM), jnp.float32)

    out, weights = attn_forward(x, params)
    out = jax.block_until_ready(out)
    weights = jax.block_until_ready(weights)

    ref_out, ref_w = ref_forward(x, params)
    assert out.shape == (BATCH, SEQ, EMBED_DIM) and weights.shape == (BATCH, SEQ, L_K)
    np.testing.assert_allclose(np.asarray(out), np.asarray(ref_out), rtol=1e-4, atol=1e-4)
    np.testing.assert_allclose(np.asarray(weights), np.asarray(ref_w), rtol=1e-4, atol=1e-4)

    print("KERNEL_OK")
</pallas_src>

<mosaic_0001>
module attributes {stable_mosaic.version = 11 : i64} {
  func.func @_attn_kernel(%arg0: i32, %arg1: memref<16x4xf32, #tpu.memory_space<vmem>>, %arg2: memref<4x160xf32, #tpu.memory_space<vmem>>, %arg3: memref<1x160xf32, #tpu.memory_space<vmem>>, %arg4: memref<32x32xf32, #tpu.memory_space<vmem>>, %arg5: memref<1x32xf32, #tpu.memory_space<vmem>>, %arg6: memref<32x64xf32, #tpu.memory_space<vmem>>, %arg7: memref<1x64xf32, #tpu.memory_space<vmem>>, %arg8: memref<32x32xf32, #tpu.memory_space<vmem>>, %arg9: memref<1x32xf32, #tpu.memory_space<vmem>>, %arg10: memref<16x128xf32, #tpu.memory_space<vmem>>) attributes {dimension_semantics = [#tpu.dimension_semantics<arbitrary>], iteration_bounds = array<i64: 1>, scalar_prefetch = 0 : i64, scratch_operands = 0 : i64, tpu.core_type = #tpu.core_type<tc>, window_params = [{pipeline_mode = #tpu.pipeline_mode<synchronous>, transform_indices = @transform_0, window_bounds = array<i64: 16, 4>}, {pipeline_mode = #tpu.pipeline_mode<synchronous>, transform_indices = @transform_1, window_bounds = array<i64: 4, 160>}, {pipeline_mode = #tpu.pipeline_mode<synchronous>, transform_indices = @transform_2, window_bounds = array<i64: 1, 160>}, {pipeline_mode = #tpu.pipeline_mode<synchronous>, transform_indices = @transform_3, window_bounds = array<i64: 32, 32>}, {pipeline_mode = #tpu.pipeline_mode<synchronous>, transform_indices = @transform_4, window_bounds = array<i64: 1, 32>}, {pipeline_mode = #tpu.pipeline_mode<synchronous>, transform_indices = @transform_5, window_bounds = array<i64: 32, 64>}, {pipeline_mode = #tpu.pipeline_mode<synchronous>, transform_indices = @transform_6, window_bounds = array<i64: 1, 64>}, {pipeline_mode = #tpu.pipeline_mode<synchronous>, transform_indices = @transform_7, window_bounds = array<i64: 32, 32>}, {pipeline_mode = #tpu.pipeline_mode<synchronous>, transform_indices = @transform_8, window_bounds = array<i64: 1, 32>}, {pipeline_mode = #tpu.pipeline_mode<synchronous>, transform_indices = @transform_9, window_bounds = array<i64: 16, 128>}]} {
    %c0 = arith.constant 0 : index
    %c0_0 = arith.constant 0 : index
    %0 = vector.load %arg1[%c0, %c0_0] : memref<16x4xf32, #tpu.memory_space<vmem>>, vector<16x4xf32>
    %c0_1 = arith.constant 0 : index
    %c0_2 = arith.constant 0 : index
    %1 = vector.load %arg2[%c0_1, %c0_2] : memref<4x160xf32, #tpu.memory_space<vmem>>, vector<4x160xf32>
    %cst = arith.constant dense<0.000000e+00> : vector<16x160xf32>
    %2 = tpu.matmul %0, %1, %cst {dimension_numbers = #tpu.dot_dimension_numbers<[1], [0], [0], [1], [0, 0, 1, 1], [], []>} : vector<16x4xf32>, vector<4x160xf32>, vector<16x160xf32> -> vector<16x160xf32>
    %c0_3 = arith.constant 0 : index
    %c0_4 = arith.constant 0 : index
    %3 = vector.load %arg3[%c0_3, %c0_4] : memref<1x160xf32, #tpu.memory_space<vmem>>, vector<1x160xf32>
    %4 = vector.broadcast %3 : vector<1x160xf32> to vector<16x160xf32>
    %5 = arith.addf %2, %4 : vector<16x160xf32>
    %cst_5 = arith.constant 0.000000e+00 : f32
    %6 = vector.broadcast %cst_5 : f32 to vector<16x160xf32>
    %7 = arith.maximumf %5, %6 : vector<16x160xf32>
    %8 = vector.extract_strided_slice %7 {offsets = [0, 0], sizes = [16, 128], strides = [1, 1]} : vector<16x160xf32> to vector<16x128xf32>
    %9 = vector.extract_strided_slice %7 {offsets = [0, 128], sizes = [16, 32], strides = [1, 1]} : vector<16x160xf32> to vector<16x32xf32>
    %10 = vector.extract_strided_slice %8 {offsets = [0, 0], sizes = [16, 32], strides = [1, 1]} : vector<16x128xf32> to vector<16x32xf32>
    %11 = vector.shape_cast %10 : vector<16x32xf32> to vector<2x8x32xf32>
    %12 = vector.extract_strided_slice %8 {offsets = [0, 32], sizes = [16, 32], strides = [1, 1]} : vector<16x128xf32> to vector<16x32xf32>
    %13 = vector.shape_cast %12 : vector<16x32xf32> to vector<2x8x32xf32>
    %14 = vector.extract_strided_slice %8 {offsets = [0, 64], sizes = [16, 32], strides = [1, 1]} : vector<16x128xf32> to vector<16x32xf32>
    %15 = vector.shape_cast %14 : vector<16x32xf32> to vector<2x8x32xf32>
    %16 = vector.extract_strided_slice %8 {offsets = [0, 96], sizes = [16, 32], strides = [1, 1]} : vector<16x128xf32> to vector<16x32xf32>
    %17 = vector.shape_cast %16 : vector<16x32xf32> to vector<2x8x32xf32>
    %18 = tpu.concatenate %11, %13, %15, %17 in 1 : vector<2x8x32xf32>, vector<2x8x32xf32>, vector<2x8x32xf32>, vector<2x8x32xf32> -> vector<2x32x32xf32>
    %19 = arith.mulf %18, %18 : vector<2x32x32xf32>
    %cst_6 = arith.constant dense<0.000000e+00> : vector<2x32xf32>
    %20 = vector.multi_reduction <add>, %19, %cst_6 [1] : vector<2x32x32xf32> to vector<2x32xf32>
    %21 = vector.shape_cast %20 : vector<2x32xf32> to vector<2x1x32xf32>
    %cst_7 = arith.constant 1.000000e-24 : f32
    %22 = vector.broadcast %cst_7 : f32 to vector<2x1x32xf32>
    %23 = arith.maximumf %21, %22 : vector<2x1x32xf32>
    %24 = math.rsqrt %23 : vector<2x1x32xf32>
    %25 = vector.broadcast %24 : vector<2x1x32xf32> to vector<2x32x32xf32>
    %26 = arith.mulf %18, %25 : vector<2x32x32xf32>
    %c0_8 = arith.constant 0 : index
    %c0_9 = arith.constant 0 : index
    %27 = vector.load %arg4[%c0_8, %c0_9] : memref<32x32xf32, #tpu.memory_space<vmem>>, vector<32x32xf32>
    %cst_10 = arith.constant dense<0.000000e+00> : vector<16x32xf32>
    %28 = tpu.matmul %9, %27, %cst_10 {dimension_numbers = #tpu.dot_dimension_numbers<[1], [0], [0], [1], [0, 0, 1, 1], [], []>} : vector<16x32xf32>, vector<32x32xf32>, vector<16x32xf32> -> vector<16x32xf32>
    %c0_11 = arith.constant 0 : index
    %c0_12 = arith.constant 0 : index
    %29 = vector.load %arg5[%c0_11, %c0_12] : memref<1x32xf32, #tpu.memory_space<vmem>>, vector<1x32xf32>
    %30 = vector.broadcast %29 : vector<1x32xf32> to vector<16x32xf32>
    %31 = arith.addf %28, %30 : vector<16x32xf32>
    %32 = vector.shape_cast %31 : vector<16x32xf32> to vector<2x8x32xf32>
    %33 = vector.shape_cast %26 : vector<2x32x32xf32> to vector<64x32xf32>
    %c0_13 = arith.constant 0 : index
    %c0_14 = arith.constant 0 : index
    %34 = vector.load %arg6[%c0_13, %c0_14] : memref<32x64xf32, #tpu.memory_space<vmem>>, vector<32x64xf32>
    %cst_15 = arith.constant dense<0.000000e+00> : vector<64x64xf32>
    %35 = tpu.matmul %33, %34, %cst_15 {dimension_numbers = #tpu.dot_dimension_numbers<[1], [0], [0], [1], [0, 0, 1, 1], [], []>} : vector<64x32xf32>, vector<32x64xf32>, vector<64x64xf32> -> vector<64x64xf32>
    %c0_16 = arith.constant 0 : index
    %c0_17 = arith.constant 0 : index
    %36 = vector.load %arg7[%c0_16, %c0_17] : memref<1x64xf32, #tpu.memory_space<vmem>>, vector<1x64xf32>
    %37 = vector.broadcast %36 : vector<1x64xf32> to vector<64x64xf32>
    %38 = arith.addf %35, %37 : vector<64x64xf32>
    %39 = vector.extract_strided_slice %38 {offsets = [0, 0], sizes = [64, 32], strides = [1, 1]} : vector<64x64xf32> to vector<64x32xf32>
    %40 = vector.shape_cast %39 : vector<64x32xf32> to vector<2x32x32xf32>
    %41 = vector.extract_strided_slice %38 {offsets = [0, 32], sizes = [64, 32], strides = [1, 1]} : vector<64x64xf32> to vector<64x32xf32>
    %42 = vector.shape_cast %41 : vector<64x32xf32> to vector<2x32x32xf32>
    %43 = vector.extract_strided_slice %32 {offsets = [0, 0, 0], sizes = [2, 8, 8], strides = [1, 1, 1]} : vector<2x8x32xf32> to vector<2x8x8xf32>
    %44 = vector.extract_strided_slice %40 {offsets = [0, 0, 0], sizes = [2, 32, 8], strides = [1, 1, 1]} : vector<2x32x32xf32> to vector<2x32x8xf32>
    "tpu.trace_start"() <{level = 10 : i32, message = "bqd,bkd->bqk"}> : () -> ()
    %cst_18 = arith.constant dense<0.000000e+00> : vector<2x8x32xf32>
    %45 = tpu.matmul %43, %44, %cst_18 {dimension_numbers = #tpu.dot_dimension_numbers<[2], [2], [1], [1], [0, 0, 0, 1, 1, 1], [0], [0]>} : vector<2x8x8xf32>, vector<2x32x8xf32>, vector<2x8x32xf32> -> vector<2x8x32xf32>
    "tpu.trace_stop"() : () -> ()
    %46 = vector.extract_strided_slice %32 {offsets = [0, 0, 8], sizes = [2, 8, 8], strides = [1, 1, 1]} : vector<2x8x32xf32> to vector<2x8x8xf32>
    %47 = vector.extract_strided_slice %40 {offsets = [0, 0, 8], sizes = [2, 32, 8], strides = [1, 1, 1]} : vector<2x32x32xf32> to vector<2x32x8xf32>
    "tpu.trace_start"() <{level = 10 : i32, message = "bqd,bkd->bqk"}> : () -> ()
    %cst_19 = arith.constant dense<0.000000e+00> : vector<2x8x32xf32>
    %48 = tpu.matmul %46, %47, %cst_19 {dimension_numbers = #tpu.dot_dimension_numbers<[2], [2], [1], [1], [0, 0, 0, 1, 1, 1], [0], [0]>} : vector<2x8x8xf32>, vector<2x32x8xf32>, vector<2x8x32xf32> -> vector<2x8x32xf32>
    "tpu.trace_stop"() : () -> ()
    %49 = vector.extract_strided_slice %32 {offsets = [0, 0, 16], sizes = [2, 8, 8], strides = [1, 1, 1]} : vector<2x8x32xf32> to vector<2x8x8xf32>
    %50 = vector.extract_strided_slice %40 {offsets = [0, 0, 16], sizes = [2, 32, 8], strides = [1, 1, 1]} : vector<2x32x32xf32> to vector<2x32x8xf32>
    "tpu.trace_start"() <{level = 10 : i32, message = "bqd,bkd->bqk"}> : () -> ()
    %cst_20 = arith.constant dense<0.000000e+00> : vector<2x8x32xf32>
    %51 = tpu.matmul %49, %50, %cst_20 {dimension_numbers = #tpu.dot_dimension_numbers<[2], [2], [1], [1], [0, 0, 0, 1, 1, 1], [0], [0]>} : vector<2x8x8xf32>, vector<2x32x8xf32>, vector<2x8x32xf32> -> vector<2x8x32xf32>
    "tpu.trace_stop"() : () -> ()
    %52 = vector.extract_strided_slice %32 {offsets = [0, 0, 24], sizes = [2, 8, 8], strides = [1, 1, 1]} : vector<2x8x32xf32> to vector<2x8x8xf32>
    %53 = vector.extract_strided_slice %40 {offsets = [0, 0, 24], sizes = [2, 32, 8], strides = [1, 1, 1]} : vector<2x32x32xf32> to vector<2x32x8xf32>
    "tpu.trace_start"() <{level = 10 : i32, message = "bqd,bkd->bqk"}> : () -> ()
    %cst_21 = arith.constant dense<0.000000e+00> : vector<2x8x32xf32>
    %54 = tpu.matmul %52, %53, %cst_21 {dimension_numbers = #tpu.dot_dimension_numbers<[2], [2], [1], [1], [0, 0, 0, 1, 1, 1], [0], [0]>} : vector<2x8x8xf32>, vector<2x32x8xf32>, vector<2x8x32xf32> -> vector<2x8x32xf32>
    "tpu.trace_stop"() : () -> ()
    %55 = tpu.concatenate %45, %48, %51, %54 in 0 : vector<2x8x32xf32>, vector<2x8x32xf32>, vector<2x8x32xf32>, vector<2x8x32xf32> -> vector<8x8x32xf32>
    %cst_22 = arith.constant 0.353553385 : f32
    %56 = vector.broadcast %cst_22 : f32 to vector<8x8x32xf32>
    %57 = arith.mulf %55, %56 : vector<8x8x32xf32>
    %cst_23 = arith.constant dense<0xFF800000> : vector<8x8xf32>
    %58 = vector.multi_reduction <maximumf>, %57, %cst_23 [2] : vector<8x8x32xf32> to vector<8x8xf32>
    %59 = vector.shape_cast %58 : vector<8x8xf32> to vector<8x8x1xf32>
    %60 = vector.broadcast %59 : vector<8x8x1xf32> to vector<8x8x32xf32>
    %61 = arith.subf %57, %60 : vector<8x8x32xf32>
    %62 = math.exp %61 : vector<8x8x32xf32>
    %cst_24 = arith.constant dense<0.000000e+00> : vector<8x8xf32>
    %63 = vector.multi_reduction <add>, %62, %cst_24 [2] : vector<8x8x32xf32> to vector<8x8xf32>
    %64 = vector.shape_cast %63 : vector<8x8xf32> to vector<8x8x1xf32>
    %65 = tpu.reciprocal %64 : vector<8x8x1xf32> -> vector<8x8x1xf32>
    %66 = vector.broadcast %65 : vector<8x8x1xf32> to vector<8x8x32xf32>
    %67 = arith.mulf %62, %66 : vector<8x8x32xf32>
    %68 = vector.extract_strided_slice %67 {offsets = [0, 0, 0], sizes = [2, 8, 32], strides = [1, 1, 1]} : vector<8x8x32xf32> to vector<2x8x32xf32>
    %69 = vector.extract_strided_slice %42 {offsets = [0, 0, 0], sizes = [2, 32, 8], strides = [1, 1, 1]} : vector<2x32x32xf32> to vector<2x32x8xf32>
    "tpu.trace_start"() <{level = 10 : i32, message = "bqk,bkd->bqd"}> : () -> ()
    %cst_25 = arith.constant dense<0.000000e+00> : vector<2x8x8xf32>
    %70 = tpu.matmul %68, %69, %cst_25 {dimension_numbers = #tpu.dot_dimension_numbers<[2], [1], [1], [2], [0, 0, 0, 1, 1, 2], [0], [0]>} : vector<2x8x32xf32>, vector<2x32x8xf32>, vector<2x8x8xf32> -> vector<2x8x8xf32>
    "tpu.trace_stop"() : () -> ()
    %71 = vector.extract_strided_slice %67 {offsets = [2, 0, 0], sizes = [2, 8, 32], strides = [1, 1, 1]} : vector<8x8x32xf32> to vector<2x8x32xf32>
    %72 = arith.addf %68, %71 : vector<2x8x32xf32>
    %73 = vector.extract_strided_slice %42 {offsets = [0, 0, 8], sizes = [2, 32, 8], strides = [1, 1, 1]} : vector<2x32x32xf32> to vector<2x32x8xf32>
    "tpu.trace_start"() <{level = 10 : i32, message = "bqk,bkd->bqd"}> : () -> ()
    %cst_26 = arith.constant dense<0.000000e+00> : vector<2x8x8xf32>
    %74 = tpu.matmul %71, %73, %cst_26 {dimension_numbers = #tpu.dot_dimension_numbers<[2], [1], [1], [2], [0, 0, 0, 1, 1, 2], [0], [0]>} : vector<2x8x32xf32>, vector<2x32x8xf32>, vector<2x8x8xf32> -> vector<2x8x8xf32>
    "tpu.trace_stop"() : () -> ()
    %75 = vector.extract_strided_slice %67 {offsets = [4, 0, 0], sizes = [2, 8, 32], strides = [1, 1, 1]} : vector<8x8x32xf32> to vector<2x8x32xf32>
    %76 = arith.addf %72, %75 : vector<2x8x32xf32>
    %77 = vector.extract_strided_slice %42 {offsets = [0, 0, 16], sizes = [2, 32, 8], strides = [1, 1, 1]} : vector<2x32x32xf32> to vector<2x32x8xf32>
    "tpu.trace_start"() <{level = 10 : i32, message = "bqk,bkd->bqd"}> : () -> ()
    %cst_27 = arith.constant dense<0.000000e+00> : vector<2x8x8xf32>
    %78 = tpu.matmul %75, %77, %cst_27 {dimension_numbers = #tpu.dot_dimension_numbers<[2], [1], [1], [2], [0, 0, 0, 1, 1, 2], [0], [0]>} : vector<2x8x32xf32>, vector<2x32x8xf32>, vector<2x8x8xf32> -> vector<2x8x8xf32>
    "tpu.trace_stop"() : () -> ()
    %79 = vector.extract_strided_slice %67 {offsets = [6, 0, 0], sizes = [2, 8, 32], strides = [1, 1, 1]} : vector<8x8x32xf32> to vector<2x8x32xf32>
    %80 = arith.addf %76, %79 : vector<2x8x32xf32>
    %81 = vector.extract_strided_slice %42 {offsets = [0, 0, 24], sizes = [2, 32, 8], strides = [1, 1, 1]} : vector<2x32x32xf32> to vector<2x32x8xf32>
    "tpu.trace_start"() <{level = 10 : i32, message = "bqk,bkd->bqd"}> : () -> ()
    %cst_28 = arith.constant dense<0.000000e+00> : vector<2x8x8xf32>
    %82 = tpu.matmul %79, %81, %cst_28 {dimension_numbers = #tpu.dot_dimension_numbers<[2], [1], [1], [2], [0, 0, 0, 1, 1, 2], [0], [0]>} : vector<2x8x32xf32>, vector<2x32x8xf32>, vector<2x8x8xf32> -> vector<2x8x8xf32>
    "tpu.trace_stop"() : () -> ()
    %cst_29 = arith.constant 2.500000e-01 : f32
    %83 = vector.broadcast %cst_29 : f32 to vector<2x8x32xf32>
    %84 = arith.mulf %80, %83 : vector<2x8x32xf32>
    %85 = tpu.concatenate %70, %74, %78, %82 in 2 : vector<2x8x8xf32>, vector<2x8x8xf32>, vector<2x8x8xf32>, vector<2x8x8xf32> -> vector<2x8x32xf32>
    %86 = vector.shape_cast %85 : vector<2x8x32xf32> to vector<16x32xf32>
    %c0_30 = arith.constant 0 : index
    %c0_31 = arith.constant 0 : index
    %87 = vector.load %arg8[%c0_30, %c0_31] : memref<32x32xf32, #tpu.memory_space<vmem>>, vector<32x32xf32>
    %cst_32 = arith.constant dense<0.000000e+00> : vector<16x32xf32>
    %88 = tpu.matmul %86, %87, %cst_32 {dimension_numbers = #tpu.dot_dimension_numbers<[1], [0], [0], [1], [0, 0, 1, 1], [], []>} : vector<16x32xf32>, vector<32x32xf32>, vector<16x32xf32> -> vector<16x32xf32>
    %c0_33 = arith.constant 0 : index
    %c0_34 = arith.constant 0 : index
    %89 = vector.load %arg9[%c0_33, %c0_34] : memref<1x32xf32, #tpu.memory_space<vmem>>, vector<1x32xf32>
    %90 = vector.broadcast %89 : vector<1x32xf32> to vector<16x32xf32>
    %91 = arith.addf %88, %90 : vector<16x32xf32>
    %cst_35 = arith.constant 0.000000e+00 : f32
    %92 = vector.broadcast %cst_35 : f32 to vector<16x64xf32>
    %93 = vector.shape_cast %84 : vector<2x8x32xf32> to vector<16x32xf32>
    %94 = tpu.concatenate %91, %93, %92 in 1 : vector<16x32xf32>, vector<16x32xf32>, vector<16x64xf32> -> vector<16x128xf32>
    %c0_36 = arith.constant 0 : index
    %c0_37 = arith.constant 0 : index
    %95 = vector.load %arg10[%c0_36, %c0_37] : memref<16x128xf32, #tpu.memory_space<vmem>>, vector<16x128xf32>
    tpu.vector_store %arg10[%c0_36, %c0_37], %94 {strides = array<i32>} : memref<16x128xf32, #tpu.memory_space<vmem>>, vector<16x128xf32>,
    return
  }
  func.func @transform_0(%arg0: i32) -> (i32, i32) {
    %c0_i32 = arith.constant 0 : i32
    %c0_i32_0 = arith.constant 0 : i32
    %c0_i32_1 = arith.constant 0 : i32
    return %c0_i32, %c0_i32_0 : i32, i32
  }
  func.func @transform_1(%arg0: i32) -> (i32, i32) {
    %c0_i32 = arith.constant 0 : i32
    %c0_i32_0 = arith.constant 0 : i32
    %c0_i32_1 = arith.constant 0 : i32
    return %c0_i32, %c0_i32_0 : i32, i32
  }
  func.func @transform_2(%arg0: i32) -> (i32, i32) {
    %c0_i32 = arith.constant 0 : i32
    %c0_i32_0 = arith.constant 0 : i32
    %c0_i32_1 = arith.constant 0 : i32
    return %c0_i32, %c0_i32_0 : i32, i32
  }
  func.func @transform_3(%arg0: i32) -> (i32, i32) {
    %c0_i32 = arith.constant 0 : i32
    %c0_i32_0 = arith.constant 0 : i32
    %c0_i32_1 = arith.constant 0 : i32
    return %c0_i32, %c0_i32_0 : i32, i32
  }
  func.func @transform_4(%arg0: i32) -> (i32, i32) {
    %c0_i32 = arith.constant 0 : i32
    %c0_i32_0 = arith.constant 0 : i32
    %c0_i32_1 = arith.constant 0 : i32
    return %c0_i32, %c0_i32_0 : i32, i32
  }
  func.func @transform_5(%arg0: i32) -> (i32, i32) {
    %c0_i32 = arith.constant 0 : i32
    %c0_i32_0 = arith.constant 0 : i32
    %c0_i32_1 = arith.constant 0 : i32
    return %c0_i32, %c0_i32_0 : i32, i32
  }
  func.func @transform_6(%arg0: i32) -> (i32, i32) {
    %c0_i32 = arith.constant 0 : i32
    %c0_i32_0 = arith.constant 0 : i32
    %c0_i32_1 = arith.constant 0 : i32
    return %c0_i32, %c0_i32_0 : i32, i32
  }
  func.func @transform_7(%arg0: i32) -> (i32, i32) {
    %c0_i32 = arith.constant 0 : i32
    %c0_i32_0 = arith.constant 0 : i32
    %c0_i32_1 = arith.constant 0 : i32
    return %c0_i32, %c0_i32_0 : i32, i32
  }
  func.func @transform_8(%arg0: i32) -> (i32, i32) {
    %c0_i32 = arith.constant 0 : i32
    %c0_i32_0 = arith.constant 0 : i32
    %c0_i32_1 = arith.constant 0 : i32
    return %c0_i32, %c0_i32_0 : i32, i32
  }
  func.func @transform_9(%arg0: i32) -> (i32, i32) {
    %c0_i32 = arith.constant 0 : i32
    %c0_i32_0 = arith.constant 0 : i32
    %c0_i32_1 = arith.constant 0 : i32
    return %c0_i32, %c0_i32_0 : i32, i32
  }
}

</mosaic_0001>

<llo_original>
// kernel: tpu_custom_call.1
$region0: #{tpu_custom_call.1}
  #allocation0 [shape = 'u32[]', space=smem, size = 0x4, offset = 0x4, fixed_abs, tag = 'smem constant byte address 0x4 - core index']
  #allocation1 [shape = 'u32[72,128]{1,0:T(1,128)}', space=vmem, size = 0x9000, scoped, tag = 'internal scratch']
  %s0 = inlined_call_operand.vmem [shape: f32[16,4], index: 0, kind: input, shape index: {}]
  %s1 = inlined_call_operand.vmem [shape: f32[4,160], index: 1, kind: input, shape index: {}]
  %s2 = inlined_call_operand.vmem [shape: f32[1,160], index: 2, kind: input, shape index: {}]
  %s3 = inlined_call_operand.hbm [shape: f32[32,32], index: 3, kind: input, shape index: {}]
  %s4 = inlined_call_operand.vmem [shape: f32[1,32], index: 4, kind: input, shape index: {}]
  %s5 = inlined_call_operand.hbm [shape: f32[32,64], index: 5, kind: input, shape index: {}]
  %s6 = inlined_call_operand.vmem [shape: f32[1,64], index: 6, kind: input, shape index: {}]
  %s7 = inlined_call_operand.hbm [shape: f32[32,32], index: 7, kind: input, shape index: {}]
  %s8 = inlined_call_operand.vmem [shape: f32[1,32], index: 8, kind: input, shape index: {}]
  %s9 = inlined_call_operand.hbm [shape: f32[16,128], index: 9, kind: output, shape index: {}]
  %s10 = sld [smem:[#allocation0]]
  $region58: #{tpu_custom_call.1} parent=0
    _
  %s12 = ssub.s32 1, %s10
  %s13 = scalar_select 0, %s12, %s10
  $region1: #{tpu_custom_call.1} parent=0
    #allocation2 [shape = 'u8[16384]{0}', space=vmem, size = 0x4000, scoped, tag = 'input window, operand 3, single buffered']
    #allocation3 [shape = 's32[1]{0}', space=sflag, size = 0x4, scoped, tag = 'scoped memory for tpu_custom_call.1']
    #allocation4 [shape = 's32[1]{0}', space=sflag, size = 0x4, scoped, tag = 'scoped memory for tpu_custom_call.1']
    #allocation5 [shape = 'u8[16384]{0}', space=vmem, size = 0x4000, scoped, tag = 'input window, operand 5, single buffered']
    #allocation6 [shape = 's32[1]{0}', space=sflag, size = 0x4, scoped, tag = 'scoped memory for tpu_custom_call.1']
    #allocation7 [shape = 'u8[16384]{0}', space=vmem, size = 0x4000, scoped, tag = 'input window, operand 7, single buffered']
    #allocation8 [shape = 'u8[8192]{0}', space=vmem, size = 0x2000, scoped, tag = 'output window, operand 0, single buffered']
    %14 = vsyncpa [#allocation3], 0
    %15 = vsyncpa [#allocation6], 0
    %16 = vsyncpa [#allocation4], 0
    // Predicated region
    $region2: #{tpu_custom_call.1} parent=1 // pred_check
      _
    $region3: #{tpu_custom_call.1} parent=1 // pred_check_branch
      %18 = sbr.rel (0) target = $region5
    $region4: #{tpu_custom_call.1} parent=1 // pred_region
      _
    $region5: #{tpu_custom_call.1} parent=1 // pred_fallthru
      _
    // Predicated region
    $region6: #{tpu_custom_call.1} parent=1 // pred_check
      _
    $region7: #{tpu_custom_call.1} parent=1 // pred_check_branch
      %20 = sbr.rel (0) target = $region9
    $region8: #{tpu_custom_call.1} parent=1 // pred_region
      _
    $region9: #{tpu_custom_call.1} parent=1 // pred_fallthru
      _
    // Predicated region
    $region10: #{tpu_custom_call.1} parent=1 // pred_check
      _
    $region11: #{tpu_custom_call.1} parent=1 // pred_check_branch
      %22 = sbr.rel (0) target = $region13
    $region12: #{tpu_custom_call.1} parent=1 // pred_region
      _
    $region13: #{tpu_custom_call.1} parent=1 // pred_fallthru
      _
    // Predicated region
    $region14: #{tpu_custom_call.1} parent=1 // pred_check
      _
    $region15: #{tpu_custom_call.1} parent=1 // pred_check_branch
      %24 = sbr.rel (0) target = $region17
    $region16: #{tpu_custom_call.1} parent=1 // pred_region
      %26 = vsyncadd [#allocation3], 0
      %s27 = sshll.u32 %s3, 4
      %s28 = int_to_ptr.hbm [resolvable:$true] %s27
      %s29 = sshll.u32 [#allocation2], 4
      %s30 = int_to_ptr.vmem [resolvable:$true] %s29
      %35 = dma.hbm_to_vmem [thread:$0]  %s28, 512, %s30, [#allocation3], 128, 128, 8
    $region17: #{tpu_custom_call.1} parent=1 // pred_fallthru
      _
    // Predicated region
    $region18: #{tpu_custom_call.1} parent=1 // pred_check
      _
    $region19: #{tpu_custom_call.1} parent=1 // pred_check_branch
      %37 = sbr.rel (0) target = $region21
    $region20: #{tpu_custom_call.1} parent=1 // pred_region
      _
    $region21: #{tpu_custom_call.1} parent=1 // pred_fallthru
      _
    // Predicated region
    $region22: #{tpu_custom_call.1} parent=1 // pred_check
      _
    $region23: #{tpu_custom_call.1} parent=1 // pred_check_branch
      %39 = sbr.rel (0) target = $region25
    $region24: #{tpu_custom_call.1} parent=1 // pred_region
      %41 = vsyncadd [#allocation6], 0
      %s42 = sshll.u32 %s5, 4
      %s43 = int_to_ptr.hbm [resolvable:$true] %s42
      %s44 = sshll.u32 [#allocation5], 4
      %s45 = int_to_ptr.vmem [resolvable:$true] %s44
      %50 = dma.hbm_to_vmem [thread:$0]  %s43, 512, %s45, [#allocation6], 128, 128, 8
    $region25: #{tpu_custom_call.1} parent=1 // pred_fallthru
      _
    // Predicated region
    $region26: #{tpu_custom_call.1} parent=1 // pred_check
      _
    $region27: #{tpu_custom_call.1} parent=1 // pred_check_branch
      %52 = sbr.rel (0) target = $region29
    $region28: #{tpu_custom_call.1} parent=1 // pred_region
      _
    $region29: #{tpu_custom_call.1} parent=1 // pred_fallthru
      _
    // Predicated region
    $region30: #{tpu_custom_call.1} parent=1 // pred_check
      _
    $region31: #{tpu_custom_call.1} parent=1 // pred_check_branch
      %54 = sbr.rel (0) target = $region33
    $region32: #{tpu_custom_call.1} parent=1 // pred_region
      %56 = vsyncadd [#allocation6], 0
      %s57 = sshll.u32 %s7, 4
      %s58 = int_to_ptr.hbm [resolvable:$true] %s57
      %s59 = sshll.u32 [#allocation7], 4
      %s60 = int_to_ptr.vmem [resolvable:$true] %s59
      %65 = dma.hbm_to_vmem [thread:$0]  %s58, 512, %s60, [#allocation6], 128, 128, 8
    $region33: #{tpu_custom_call.1} parent=1 // pred_fallthru
      _
    // Predicated region
    $region34: #{tpu_custom_call.1} parent=1 // pred_check
      _
    $region35: #{tpu_custom_call.1} parent=1 // pred_check_branch
      %67 = sbr.rel (0) target = $region37
    $region36: #{tpu_custom_call.1} parent=1 // pred_region
      _
    $region37: #{tpu_custom_call.1} parent=1 // pred_fallthru
      _
    // Predicated region
    $region38: #{tpu_custom_call.1} parent=1 // pred_check
      _
    $region39: #{tpu_custom_call.1} parent=1 // pred_check_branch
      %69 = sbr.rel (0) target = $region41
    $region40: #{tpu_custom_call.1} parent=1 // pred_region
      %71 = dma.done [#allocation3], 512
    $region41: #{tpu_custom_call.1} parent=1 // pred_fallthru
      _
    // Predicated region
    $region42: #{tpu_custom_call.1} parent=1 // pred_check
      _
    $region43: #{tpu_custom_call.1} parent=1 // pred_check_branch
      %73 = sbr.rel (0) target = $region45
    $region44: #{tpu_custom_call.1} parent=1 // pred_region
      %75 = dma.done [#allocation6], 512
    $region45: #{tpu_custom_call.1} parent=1 // pred_fallthru
      _
    // Predicated region
    $region46: #{tpu_custom_call.1} parent=1 // pred_check
      _
    $region47: #{tpu_custom_call.1} parent=1 // pred_check_branch
      %77 = sbr.rel (0) target = $region49
    $region48: #{tpu_custom_call.1} parent=1 // pred_region
      %79 = dma.done [#allocation6], 512
    $region49: #{tpu_custom_call.1} parent=1 // pred_fallthru
      _
    %v80 = vld [vmem:[%s0] sm:$0xff]
    %v81 = vld [vmem:[%s0 + $0x8] sm:$0xff]
    %v82 = vld [vmem:[%s1] sm:$0xff]
    %v83 = vld [vmem:[%s2] sm:$0x3]
    %v85 = vperm.slane %v83, 0
    %v86 = vperm.slane %v83, 1
    %90 = vst [vmem:[#allocation1] ss:$2 sm:$0xff] %v82
    %v91 = vld.sshfl [vmem:[#allocation1] sm:$0xff pattern:$0x75316420]
    %v92 = vld.sshfl [vmem:[#allocation1 + $0x8] sm:$0xff pattern:$0x75316420]
    %vm93 = vcmask 31744
    %v95 = vsel %vm93, %v80, 0
    %v98 = vsel %vm93, %v81, 0
    %vm100 = vcmask 1043456
    %v101 = vsel %vm100, %v91, 0
    %v103 = vsel %vm100, %v92, 0
    %105 = vmatpush.msra.mxu0 0.0
    %106 = vmatpush.msra.mxu0 0.0
    %107 = vmatpush.msra.mxu0 0.0
    %108 = vmatpush.msra.mxu0 0.0
    %109 = vmatpush.msra.mxu0 0.0
    %110 = vmatpush.msra.mxu0 0.0
    %111 = vmatpush.msra.mxu0 0.0
    %112 = vmatpush.msra.mxu0 0.0
    %113 = vmatpush.msra.mxu0 0.0
    %114 = vmatpush.msra.mxu0 0.0
    %115 = vmatpush.msra.mxu0 0.0
    %116 = vmatpush.msra.mxu0 0.0
    %117 = vmatpush.msra.mxu0 0.0
    %118 = vmatpush.msra.mxu0 0.0
    %119 = vmatpush.msra.mxu0 0.0
    %120 = vmatpush.msra.mxu0 %v101
    %121 = vmatmul.f32.gmra.mxu0 %v95
    %v122 = vpop.f32.mrf.mxu0
    %v123 = vadd.f32 %v85, %v122
    %124 = vmatmul.f32.gmra.mxu0 %v98
    %v125 = vpop.f32.mrf.mxu0
    %v126 = vadd.f32 %v85, %v125
    %127 = vdwg.mxu0
    %128 = vmatpush.msra.mxu0 0.0
    %129 = vmatpush.msra.mxu0 0.0
    %130 = vmatpush.msra.mxu0 0.0
    %131 = vmatpush.msra.mxu0 0.0
    %132 = vmatpush.msra.mxu0 0.0
    %133 = vmatpush.msra.mxu0 0.0
    %134 = vmatpush.msra.mxu0 0.0
    %135 = vmatpush.msra.mxu0 0.0
    %136 = vmatpush.msra.mxu0 0.0
    %137 = vmatpush.msra.mxu0 0.0
    %138 = vmatpush.msra.mxu0 0.0
    %139 = vmatpush.msra.mxu0 0.0
    %140 = vmatpush.msra.mxu0 0.0
    %141 = vmatpush.msra.mxu0 0.0
    %142 = vmatpush.msra.mxu0 0.0
    %143 = vmatpush.msra.mxu0 %v103
    %144 = vmatmul.f32.gmra.mxu0 %v95
    %v145 = vpop.f32.mrf.mxu0
    %v146 = vadd.f32 %v86, %v145
    %147 = vmatmul.f32.gmra.mxu0 %v98
    %v148 = vpop.f32.mrf.mxu0
    %v149 = vadd.f32 %v86, %v148
    %150 = vdwg.mxu0
    %v151 = vmax.f32 %v123, 0.0
    %v152 = vmax.f32 %v146, 0.0
    %v153 = vmax.f32 %v126, 0.0
    %v154 = vmax.f32 %v149, 0.0
    %157 = vrot.lane.b32.xlu0 %v151, 96
    %v158 = vpop.permute.xlu0 %157
    %159 = vrot.lane.b32.xlu0 %v153, 96
    %v160 = vpop.permute.xlu0 %159
    %163 = vrot.lane.b32.xlu0 %v151, 64
    %v164 = vpop.permute.xlu0 %163
    %165 = vrot.lane.b32.xlu0 %v153, 64
    %v166 = vpop.permute.xlu0 %165
    %169 = vrot.lane.b32.xlu0 %v151, 32
    %v170 = vpop.permute.xlu0 %169
    %171 = vrot.lane.b32.xlu0 %v153, 32
    %v172 = vpop.permute.xlu0 %171
    %v175 = vmul.f32 %v151, %v151
    %v176 = vmul.f32 %v158, %v158
    %v177 = vmul.f32 %v164, %v164
    %v178 = vmul.f32 %v170, %v170
    %v179 = vmul.f32 %v153, %v153
    %v180 = vmul.f32 %v160, %v160
    %v181 = vmul.f32 %v166, %v166
    %v182 = vmul.f32 %v172, %v172
    %vm183 = vcmask 261120
    %v184 = vsel %vm183, %v175, 0.0
    %v185 = vsel %vm183, %v176, 0.0
    %v186 = vadd.f32 %v184, %v185
    %v187 = vsel %vm183, %v177, 0.0
    %v188 = vadd.f32 %v186, %v187
    %v189 = vsel %vm183, %v178, 0.0
    %v190 = vadd.f32 %v188, %v189
    %v191 = vrot.slane %v190, 4
    %v192 = vadd.f32 %v190, %v191
    %v193 = vrot.slane %v192, 2
    %v194 = vadd.f32 %v192, %v193
    %v195 = vrot.slane %v194, 1
    %v196 = vadd.f32 %v194, %v195
    %v197 = vsel %vm183, %v179, 0.0
    %v198 = vsel %vm183, %v180, 0.0
    %v199 = vadd.f32 %v197, %v198
    %v200 = vsel %vm183, %v181, 0.0
    %v201 = vadd.f32 %v199, %v200
    %v202 = vsel %vm183, %v182, 0.0
    %v203 = vadd.f32 %v201, %v202
    %v204 = vrot.slane %v203, 4
    %v205 = vadd.f32 %v203, %v204
    %v206 = vrot.slane %v205, 2
    %v207 = vadd.f32 %v205, %v206
    %v208 = vrot.slane %v207, 1
    %v209 = vadd.f32 %v207, %v208
    %v210 = vmax.f32 %v196, 1e-24
    %v211 = vmax.f32 %v209, 1e-24
    %v212 = vrsqrt.pop %v210
    %v213 = vmul.f32 %v212, %v210
    %v214 = vmul.f32 %v213, %v212
    %v215 = vmul.f32 0.5, %v214
    %v216 = vsub.f32 1.5, %v215
    %v217 = vmul.f32 %v212, %v216
    %vm218 = vweird.f32 %v210
    %vm219 = vweird.f32 %v212
    %vm220 = vmor %vm218, %vm219
    %v221 = vsel %vm220, %v212, %v217
    %v222 = vrsqrt.pop %v211
    %v223 = vmul.f32 %v222, %v211
    %v224 = vmul.f32 %v223, %v222
    %v225 = vmul.f32 0.5, %v224
    %v226 = vsub.f32 1.5, %v225
    %v227 = vmul.f32 %v222, %v226
    %vm228 = vweird.f32 %v211
    %vm229 = vweird.f32 %v222
    %vm230 = vmor %vm228, %vm229
    %v231 = vsel %vm230, %v222, %v227
    %v232 = vmul.f32 %v151, %v221
    %v233 = vmul.f32 %v158, %v221
    %v234 = vmul.f32 %v164, %v221
    %v235 = vmul.f32 %v170, %v221
    %v236 = vmul.f32 %v153, %v231
    %v237 = vmul.f32 %v160, %v231
    %v238 = vmul.f32 %v166, %v231
    %v239 = vmul.f32 %v172, %v231
    %v240 = vld [vmem:[#allocation2] sm:$0xff]
    %v241 = vld [vmem:[#allocation2 + $0x8] sm:$0xff]
    %v242 = vld [vmem:[#allocation2 + $0x10] sm:$0xff]
    %v243 = vld [vmem:[#allocation2 + $0x18] sm:$0xff]
    %v244 = vld [vmem:[%s4] sm:$0x1]
    %v246 = vperm.slane %v244, 0
    %v249 = vsel %vm183, %v152, 0
    %v252 = vsel %vm183, %v154, 0
    %254 = vmatpush.msra.mxu0 0.0
    %255 = vmatpush.msra.mxu0 0.0
    %256 = vmatpush.msra.mxu0 0.0
    %257 = vmatpush.msra.mxu0 0.0
    %258 = vmatpush.msra.mxu0 0.0
    %259 = vmatpush.msra.mxu0 0.0
    %260 = vmatpush.msra.mxu0 0.0
    %261 = vmatpush.msra.mxu0 0.0
    %262 = vmatpush.msra.mxu0 0.0
    %263 = vmatpush.msra.mxu0 0.0
    %264 = vmatpush.msra.mxu0 0.0
    %265 = vmatpush.msra.mxu0 0.0
    %266 = vmatpush.msra.mxu0 %v243
    %267 = vmatpush.msra.mxu0 %v242
    %268 = vmatpush.msra.mxu0 %v241
    %269 = vmatpush.msra.mxu0 %v240
    %270 = vmatmul.f32.gmra.mxu0 %v249
    %v271 = vpop.f32.mrf.mxu0
    %v272 = vadd.f32 %v246, %v271
    %273 = vmatmul.f32.gmra.mxu0 %v252
    %v274 = vpop.f32.mrf.mxu0
    %v275 = vadd.f32 %v246, %v274
    %276 = vdwg.mxu0
    %v277 = vld [vmem:[#allocation5] sm:$0xff]
    %v278 = vld [vmem:[#allocation5 + $0x8] sm:$0xff]
    %v279 = vld [vmem:[#allocation5 + $0x10] sm:$0xff]
    %v280 = vld [vmem:[#allocation5 + $0x18] sm:$0xff]
    %v281 = vld [vmem:[%s6] sm:$0x1]
    %v283 = vperm.slane %v281, 0
    %v286 = vsel %vm183, %v232, 0
    %v289 = vsel %vm183, %v233, 0
    %v292 = vsel %vm183, %v234, 0
    %v295 = vsel %vm183, %v235, 0
    %v298 = vsel %vm183, %v236, 0
    %v301 = vsel %vm183, %v237, 0
    %v304 = vsel %vm183, %v238, 0
    %v307 = vsel %vm183, %v239, 0
    %309 = vmatpush.msra.mxu0 0.0
    %310 = vmatpush.msra.mxu0 0.0
    %311 = vmatpush.msra.mxu0 0.0
    %312 = vmatpush.msra.mxu0 0.0
    %313 = vmatpush.msra.mxu0 0.0
    %314 = vmatpush.msra.mxu0 0.0
    %315 = vmatpush.msra.mxu0 0.0
    %316 = vmatpush.msra.mxu0 0.0
    %317 = vmatpush.msra.mxu0 0.0
    %318 = vmatpush.msra.mxu0 0.0
    %319 = vmatpush.msra.mxu0 0.0
    %320 = vmatpush.msra.mxu0 0.0
    %321 = vmatpush.msra.mxu0 %v280
    %322 = vmatpush.msra.mxu0 %v279
    %323 = vmatpush.msra.mxu0 %v278
    %324 = vmatpush.msra.mxu0 %v277
    %325 = vmatmul.f32.gmra.mxu0 %v286
    %v326 = vpop.f32.mrf.mxu0
    %v327 = vadd.f32 %v283, %v326
    %328 = vmatmul.f32.gmra.mxu0 %v289
    %v329 = vpop.f32.mrf.mxu0
    %v330 = vadd.f32 %v283, %v329
    %331 = vmatmul.f32.gmra.mxu0 %v292
    %v332 = vpop.f32.mrf.mxu0
    %v333 = vadd.f32 %v283, %v332
    %334 = vmatmul.f32.gmra.mxu0 %v295
    %v335 = vpop.f32.mrf.mxu0
    %v336 = vadd.f32 %v283, %v335
    %337 = vmatmul.f32.gmra.mxu0 %v298
    %v338 = vpop.f32.mrf.mxu0
    %v339 = vadd.f32 %v283, %v338
    %340 = vmatmul.f32.gmra.mxu0 %v301
    %v341 = vpop.f32.mrf.mxu0
    %v342 = vadd.f32 %v283, %v341
    %343 = vmatmul.f32.gmra.mxu0 %v304
    %v344 = vpop.f32.mrf.mxu0
    %v345 = vadd.f32 %v283, %v344
    %346 = vmatmul.f32.gmra.mxu0 %v307
    %v347 = vpop.f32.mrf.mxu0
    %v348 = vadd.f32 %v283, %v347
    %349 = vdwg.mxu0
    %vm350 = vcmask 64512
    %v352 = vsel %vm350, %v272, 0
    %v355 = vsel %vm350, %v327, 0
    %v358 = vsel %vm350, %v330, 0
    %v361 = vsel %vm350, %v333, 0
    %v364 = vsel %vm350, %v336, 0
    %366 = vmatpush.xpose.msra.mxu0 0.0
    %367 = vmatpush.xpose.msra.mxu0 0.0
    %368 = vmatpush.xpose.msra.mxu0 0.0
    %369 = vmatpush.xpose.msra.mxu0 0.0
    %370 = vmatpush.xpose.msra.mxu0 0.0
    %371 = vmatpush.xpose.msra.mxu0 0.0
    %372 = vmatpush.xpose.msra.mxu0 0.0
    %373 = vmatpush.xpose.msra.mxu0 0.0
    %374 = vmatpush.xpose.msra.mxu0 0.0
    %375 = vmatpush.xpose.msra.mxu0 0.0
    %376 = vmatpush.xpose.msra.mxu0 0.0
    %377 = vmatpush.xpose.msra.mxu0 0.0
    %378 = vmatpush.xpose.msra.mxu0 %v364
    %379 = vmatpush.xpose.msra.mxu0 %v361
    %380 = vmatpush.xpose.msra.mxu0 %v358
    %381 = vmatpush.xpose.msra.mxu0 %v355
    %382 = vmatmul.f32.gmra.mxu0 %v352
    %v383 = vpop.f32.mrf.mxu0
    %v384 = vadd.f32 0.0, %v383
    %385 = vdwg.mxu0
    %v387 = vsel %vm350, %v275, 0
    %v390 = vsel %vm350, %v339, 0
    %v393 = vsel %vm350, %v342, 0
    %v396 = vsel %vm350, %v345, 0
    %v399 = vsel %vm350, %v348, 0
    %401 = vmatpush.xpose.msra.mxu0 0.0
    %402 = vmatpush.xpose.msra.mxu0 0.0
    %403 = vmatpush.xpose.msra.mxu0 0.0
    %404 = vmatpush.xpose.msra.mxu0 0.0
    %405 = vmatpush.xpose.msra.mxu0 0.0
    %406 = vmatpush.xpose.msra.mxu0 0.0
    %407 = vmatpush.xpose.msra.mxu0 0.0
    %408 = vmatpush.xpose.msra.mxu0 0.0
    %409 = vmatpush.xpose.msra.mxu0 0.0
    %410 = vmatpush.xpose.msra.mxu0 0.0
    %411 = vmatpush.xpose.msra.mxu0 0.0
    %412 = vmatpush.xpose.msra.mxu0 0.0
    %413 = vmatpush.xpose.msra.mxu0 %v399
    %414 = vmatpush.xpose.msra.mxu0 %v396
    %415 = vmatpush.xpose.msra.mxu0 %v393
    %416 = vmatpush.xpose.msra.mxu0 %v390
    %417 = vmatmul.f32.gmra.mxu0 %v387
    %v418 = vpop.f32.mrf.mxu0
    %v419 = vadd.f32 0.0, %v418
    %420 = vdwg.mxu0
    %421 = vrot.lane.b32.xlu0 %v272, 120
    %v422 = vpop.permute.xlu0 %421
    %423 = vrot.lane.b32.xlu0 %v327, 120
    %v424 = vpop.permute.xlu0 %423
    %425 = vrot.lane.b32.xlu0 %v330, 120
    %v426 = vpop.permute.xlu0 %425
    %427 = vrot.lane.b32.xlu0 %v333, 120
    %v428 = vpop.permute.xlu0 %427
    %429 = vrot.lane.b32.xlu0 %v336, 120
    %v430 = vpop.permute.xlu0 %429
    %v431 = vsel %vm350, %v422, 0
    %v433 = vsel %vm350, %v424, 0
    %v435 = vsel %vm350, %v426, 0
    %v437 = vsel %vm350, %v428, 0
    %v439 = vsel %vm350, %v430, 0
    %441 = vmatpush.xpose.msra.mxu0 0.0
    %442 = vmatpush.xpose.msra.mxu0 0.0
    %443 = vmatpush.xpose.msra.mxu0 0.0
    %444 = vmatpush.xpose.msra.mxu0 0.0
    %445 = vmatpush.xpose.msra.mxu0 0.0
    %446 = vmatpush.xpose.msra.mxu0 0.0
    %447 = vmatpush.xpose.msra.mxu0 0.0
    %448 = vmatpush.xpose.msra.mxu0 0.0
    %449 = vmatpush.xpose.msra.mxu0 0.0
    %450 = vmatpush.xpose.msra.mxu0 0.0
    %451 = vmatpush.xpose.msra.mxu0 0.0
    %452 = vmatpush.xpose.msra.mxu0 0.0
    %453 = vmatpush.xpose.msra.mxu0 %v439
    %454 = vmatpush.xpose.msra.mxu0 %v437
    %455 = vmatpush.xpose.msra.mxu0 %v435
    %456 = vmatpush.xpose.msra.mxu0 %v433
    %457 = vmatmul.f32.gmra.mxu0 %v431
    %v458 = vpop.f32.mrf.mxu0
    %v459 = vadd.f32 0.0, %v458
    %460 = vdwg.mxu0
    %461 = vrot.lane.b32.xlu0 %v275, 120
    %v462 = vpop.permute.xlu0 %461
    %463 = vrot.lane.b32.xlu0 %v339, 120
    %v464 = vpop.permute.xlu0 %463
    %465 = vrot.lane.b32.xlu0 %v342, 120
    %v466 = vpop.permute.xlu0 %465
    %467 = vrot.lane.b32.xlu0 %v345, 120
    %v468 = vpop.permute.xlu0 %467
    %469 = vrot.lane.b32.xlu0 %v348, 120
    %v470 = vpop.permute.xlu0 %469
    %v471 = vsel %vm350, %v462, 0
    %v473 = vsel %vm350, %v464, 0
    %v475 = vsel %vm350, %v466, 0
    %v477 = vsel %vm350, %v468, 0
    %v479 = vsel %vm350, %v470, 0
    %481 = vmatpush.xpose.msra.mxu0 0.0
    %482 = vmatpush.xpose.msra.mxu0 0.0
    %483 = vmatpush.xpose.msra.mxu0 0.0
    %484 = vmatpush.xpose.msra.mxu0 0.0
    %485 = vmatpush.xpose.msra.mxu0 0.0
    %486 = vmatpush.xpose.msra.mxu0 0.0
    %487 = vmatpush.xpose.msra.mxu0 0.0
    %488 = vmatpush.xpose.msra.mxu0 0.0
    %489 = vmatpush.xpose.msra.mxu0 0.0
    %490 = vmatpush.xpose.msra.mxu0 0.0
    %491 = vmatpush.xpose.msra.mxu0 0.0
    %492 = vmatpush.xpose.msra.mxu0 0.0
    %493 = vmatpush.xpose.msra.mxu0 %v479
    %494 = vmatpush.xpose.msra.mxu0 %v477
    %495 = vmatpush.xpose.msra.mxu0 %v475
    %496 = vmatpush.xpose.msra.mxu0 %v473
    %497 = vmatmul.f32.gmra.mxu0 %v471
    %v498 = vpop.f32.mrf.mxu0
    %v499 = vadd.f32 0.0, %v498
    %500 = vdwg.mxu0
    %501 = vrot.lane.b32.xlu0 %v272, 112
    %v502 = vpop.permute.xlu0 %501
    %503 = vrot.lane.b32.xlu0 %v327, 112
    %v504 = vpop.permute.xlu0 %503
    %505 = vrot.lane.b32.xlu0 %v330, 112
    %v506 = vpop.permute.xlu0 %505
    %507 = vrot.lane.b32.xlu0 %v333, 112
    %v508 = vpop.permute.xlu0 %507
    %509 = vrot.lane.b32.xlu0 %v336, 112
    %v510 = vpop.permute.xlu0 %509
    %v511 = vsel %vm350, %v502, 0
    %v513 = vsel %vm350, %v504, 0
    %v515 = vsel %vm350, %v506, 0
    %v517 = vsel %vm350, %v508, 0
    %v519 = vsel %vm350, %v510, 0
    %521 = vmatpush.xpose.msra.mxu0 0.0
    %522 = vmatpush.xpose.msra.mxu0 0.0
    %523 = vmatpush.xpose.msra.mxu0 0.0
    %524 = vmatpush.xpose.msra.mxu0 0.0
    %525 = vmatpush.xpose.msra.mxu0 0.0
    %526 = vmatpush.xpose.msra.mxu0 0.0
    %527 = vmatpush.xpose.msra.mxu0 0.0
    %528 = vmatpush.xpose.msra.mxu0 0.0
    %529 = vmatpush.xpose.msra.mxu0 0.0
    %530 = vmatpush.xpose.msra.mxu0 0.0
    %531 = vmatpush.xpose.msra.mxu0 0.0
    %532 = vmatpush.xpose.msra.mxu0 0.0
    %533 = vmatpush.xpose.msra.mxu0 %v519
    %534 = vmatpush.xpose.msra.mxu0 %v517
    %535 = vmatpush.xpose.msra.mxu0 %v515
    %536 = vmatpush.xpose.msra.mxu0 %v513
    %537 = vmatmul.f32.gmra.mxu0 %v511
    %v538 = vpop.f32.mrf.mxu0
    %v539 = vadd.f32 0.0, %v538
    %540 = vdwg.mxu0
    %541 = vrot.lane.b32.xlu0 %v275, 112
    %v542 = vpop.permute.xlu0 %541
    %543 = vrot.lane.b32.xlu0 %v339, 112
    %v544 = vpop.permute.xlu0 %543
    %545 = vrot.lane.b32.xlu0 %v342, 112
    %v546 = vpop.permute.xlu0 %545
    %547 = vrot.lane.b32.xlu0 %v345, 112
    %v548 = vpop.permute.xlu0 %547
    %549 = vrot.lane.b32.xlu0 %v348, 112
    %v550 = vpop.permute.xlu0 %549
    %v551 = vsel %vm350, %v542, 0
    %v553 = vsel %vm350, %v544, 0
    %v555 = vsel %vm350, %v546, 0
    %v557 = vsel %vm350, %v548, 0
    %v559 = vsel %vm350, %v550, 0
    %561 = vmatpush.xpose.msra.mxu0 0.0
    %562 = vmatpush.xpose.msra.mxu0 0.0
    %563 = vmatpush.xpose.msra.mxu0 0.0
    %564 = vmatpush.xpose.msra.mxu0 0.0
    %565 = vmatpush.xpose.msra.mxu0 0.0
    %566 = vmatpush.xpose.msra.mxu0 0.0
    %567 = vmatpush.xpose.msra.mxu0 0.0
    %568 = vmatpush.xpose.msra.mxu0 0.0
    %569 = vmatpush.xpose.msra.mxu0 0.0
    %570 = vmatpush.xpose.msra.mxu0 0.0
    %571 = vmatpush.xpose.msra.mxu0 0.0
    %572 = vmatpush.xpose.msra.mxu0 0.0
    %573 = vmatpush.xpose.msra.mxu0 %v559
    %574 = vmatpush.xpose.msra.mxu0 %v557
    %575 = vmatpush.xpose.msra.mxu0 %v555
    %576 = vmatpush.xpose.msra.mxu0 %v553
    %577 = vmatmul.f32.gmra.mxu0 %v551
    %v578 = vpop.f32.mrf.mxu0
    %v579 = vadd.f32 0.0, %v578
    %580 = vdwg.mxu0
    %581 = vrot.lane.b32.xlu0 %v272, 104
    %v582 = vpop.permute.xlu0 %581
    %583 = vrot.lane.b32.xlu0 %v327, 104
    %v584 = vpop.permute.xlu0 %583
    %585 = vrot.lane.b32.xlu0 %v330, 104
    %v586 = vpop.permute.xlu0 %585
    %587 = vrot.lane.b32.xlu0 %v333, 104
    %v588 = vpop.permute.xlu0 %587
    %589 = vrot.lane.b32.xlu0 %v336, 104
    %v590 = vpop.permute.xlu0 %589
    %v591 = vsel %vm350, %v582, 0
    %v593 = vsel %vm350, %v584, 0
    %v595 = vsel %vm350, %v586, 0
    %v597 = vsel %vm350, %v588, 0
    %v599 = vsel %vm350, %v590, 0
    %601 = vmatpush.xpose.msra.mxu0 0.0
    %602 = vmatpush.xpose.msra.mxu0 0.0
    %603 = vmatpush.xpose.msra.mxu0 0.0
    %604 = vmatpush.xpose.msra.mxu0 0.0
    %605 = vmatpush.xpose.msra.mxu0 0.0
    %606 = vmatpush.xpose.msra.mxu0 0.0
    %607 = vmatpush.xpose.msra.mxu0 0.0
    %608 = vmatpush.xpose.msra.mxu0 0.0
    %609 = vmatpush.xpose.msra.mxu0 0.0
    %610 = vmatpush.xpose.msra.mxu0 0.0
    %611 = vmatpush.xpose.msra.mxu0 0.0
    %612 = vmatpush.xpose.msra.mxu0 0.0
    %613 = vmatpush.xpose.msra.mxu0 %v599
    %614 = vmatpush.xpose.msra.mxu0 %v597
    %615 = vmatpush.xpose.msra.mxu0 %v595
    %616 = vmatpush.xpose.msra.mxu0 %v593
    %617 = vmatmul.f32.gmra.mxu0 %v591
    %v618 = vpop.f32.mrf.mxu0
    %v619 = vadd.f32 0.0, %v618
    %620 = vdwg.mxu0
    %621 = vrot.lane.b32.xlu0 %v275, 104
    %v622 = vpop.permute.xlu0 %621
    %623 = vrot.lane.b32.xlu0 %v339, 104
    %v624 = vpop.permute.xlu0 %623
    %625 = vrot.lane.b32.xlu0 %v342, 104
    %v626 = vpop.permute.xlu0 %625
    %627 = vrot.lane.b32.xlu0 %v345, 104
    %v628 = vpop.permute.xlu0 %627
    %629 = vrot.lane.b32.xlu0 %v348, 104
    %v630 = vpop.permute.xlu0 %629
    %v631 = vsel %vm350, %v622, 0
    %v633 = vsel %vm350, %v624, 0
    %v635 = vsel %vm350, %v626, 0
    %v637 = vsel %vm350, %v628, 0
    %v639 = vsel %vm350, %v630, 0
    %641 = vmatpush.xpose.msra.mxu0 0.0
    %642 = vmatpush.xpose.msra.mxu0 0.0
    %643 = vmatpush.xpose.msra.mxu0 0.0
    %644 = vmatpush.xpose.msra.mxu0 0.0
    %645 = vmatpush.xpose.msra.mxu0 0.0
    %646 = vmatpush.xpose.msra.mxu0 0.0
    %647 = vmatpush.xpose.msra.mxu0 0.0
    %648 = vmatpush.xpose.msra.mxu0 0.0
    %649 = vmatpush.xpose.msra.mxu0 0.0
    %650 = vmatpush.xpose.msra.mxu0 0.0
    %651 = vmatpush.xpose.msra.mxu0 0.0
    %652 = vmatpush.xpose.msra.mxu0 0.0
    %653 = vmatpush.xpose.msra.mxu0 %v639
    %654 = vmatpush.xpose.msra.mxu0 %v637
    %655 = vmatpush.xpose.msra.mxu0 %v635
    %656 = vmatpush.xpose.msra.mxu0 %v633
    %657 = vmatmul.f32.gmra.mxu0 %v631
    %v658 = vpop.f32.mrf.mxu0
    %v659 = vadd.f32 0.0, %v658
    %660 = vdwg.mxu0
    %v661 = vmul.f32 %v384, 0.35355338
    %v662 = vmul.f32 %v419, 0.35355338
    %v663 = vmul.f32 %v459, 0.35355338
    %v664 = vmul.f32 %v499, 0.35355338
    %v665 = vmul.f32 %v539, 0.35355338
    %v666 = vmul.f32 %v579, 0.35355338
    %v667 = vmul.f32 %v619, 0.35355338
    %v668 = vmul.f32 %v659, 0.35355338
    %v669 = vsel %vm183, %v661, -inf
    %670 = vmax.xlane.f32.xlu0 %v669
    %v671 = vpop.xlane.xlu0 %670
    %v672 = vsel %vm183, %v662, -inf
    %673 = vmax.xlane.f32.xlu0 %v672
    %v674 = vpop.xlane.xlu0 %673
    %v675 = vsel %vm183, %v663, -inf
    %676 = vmax.xlane.f32.xlu0 %v675
    %v677 = vpop.xlane.xlu0 %676
    %v678 = vsel %vm183, %v664, -inf
    %679 = vmax.xlane.f32.xlu0 %v678
    %v680 = vpop.xlane.xlu0 %679
    %v681 = vsel %vm183, %v665, -inf
    %682 = vmax.xlane.f32.xlu0 %v681
    %v683 = vpop.xlane.xlu0 %682
    %v684 = vsel %vm183, %v666, -inf
    %685 = vmax.xlane.f32.xlu0 %v684
    %v686 = vpop.xlane.xlu0 %685
    %v687 = vsel %vm183, %v667, -inf
    %688 = vmax.xlane.f32.xlu0 %v687
    %v689 = vpop.xlane.xlu0 %688
    %v690 = vsel %vm183, %v668, -inf
    %691 = vmax.xlane.f32.xlu0 %v690
    %v692 = vpop.xlane.xlu0 %691
    %v693 = vsub.f32 %v661, %v671
    %v694 = vsub.f32 %v662, %v674
    %v695 = vsub.f32 %v663, %v677
    %v696 = vsub.f32 %v664, %v680
    %v697 = vsub.f32 %v665, %v683
    %v698 = vsub.f32 %v666, %v686
    %v699 = vsub.f32 %v667, %v689
    %v700 = vsub.f32 %v668, %v692
    %v701 = vmul.f32 %v693, 1.442695
    %v702 = vpow.pop %v701
    %v703 = vmul.f32 %v694, 1.442695
    %v704 = vpow.pop %v703
    %v705 = vmul.f32 %v695, 1.442695
    %v706 = vpow.pop %v705
    %v707 = vmul.f32 %v696, 1.442695
    %v708 = vpow.pop %v707
    %v709 = vmul.f32 %v697, 1.442695
    %v710 = vpow.pop %v709
    %v711 = vmul.f32 %v698, 1.442695
    %v712 = vpow.pop %v711
    %v713 = vmul.f32 %v699, 1.442695
    %v714 = vpow.pop %v713
    %v715 = vmul.f32 %v700, 1.442695
    %v716 = vpow.pop %v715
    %v717 = vsel %vm183, %v702, 0.0
    %718 = vadd.xlane.f32.xlu0 %v717
    %v719 = vpop.xlane.xlu0 %718
    %v720 = vsel %vm183, %v704, 0.0
    %721 = vadd.xlane.f32.xlu0 %v720
    %v722 = vpop.xlane.xlu0 %721
    %v723 = vsel %vm183, %v706, 0.0
    %724 = vadd.xlane.f32.xlu0 %v723
    %v725 = vpop.xlane.xlu0 %724
    %v726 = vsel %vm183, %v708, 0.0
    %727 = vadd.xlane.f32.xlu0 %v726
    %v728 = vpop.xlane.xlu0 %727
    %v729 = vsel %vm183, %v710, 0.0
    %730 = vadd.xlane.f32.xlu0 %v729
    %v731 = vpop.xlane.xlu0 %730
    %v732 = vsel %vm183, %v712, 0.0
    %733 = vadd.xlane.f32.xlu0 %v732
    %v734 = vpop.xlane.xlu0 %733
    %v735 = vsel %vm183, %v714, 0.0
    %736 = vadd.xlane.f32.xlu0 %v735
    %v737 = vpop.xlane.xlu0 %736
    %v738 = vsel %vm183, %v716, 0.0
    %739 = vadd.xlane.f32.xlu0 %v738
    %v740 = vpop.xlane.xlu0 %739
    %v741 = vrcp.pop %v719
    %v742 = vmul.f32 %v719, %v741
    %v743 = vsub.f32 1.0, %v742
    %v744 = vmul.f32 %v741, %v743
    %v745 = vadd.f32 %v741, %v744
    %vm746 = vweird.f32 %v719
    %vm747 = vweird.f32 %v741
    %vm748 = vmor %vm746, %vm747
    %v749 = vsel %vm748, %v741, %v745
    %v750 = vand.u32 2147483647, %v719
    %vm751 = vcmp.eq.f32.partialorder %v750, 8.507059e+37
    %v752 = vand.u32 %v719, 2147483648
    %v753 = vor.u32 1.1754944e-38, %v752
    %v754 = vsel %vm751, %v753, %v749
    %v755 = vrcp.pop %v722
    %v756 = vmul.f32 %v722, %v755
    %v757 = vsub.f32 1.0, %v756
    %v758 = vmul.f32 %v755, %v757
    %v759 = vadd.f32 %v755, %v758
    %vm760 = vweird.f32 %v722
    %vm761 = vweird.f32 %v755
    %vm762 = vmor %vm760, %vm761
    %v763 = vsel %vm762, %v755, %v759
    %v764 = vand.u32 2147483647, %v722
    %vm765 = vcmp.eq.f32.partialorder %v764, 8.507059e+37
    %v766 = vand.u32 %v722, 2147483648
    %v767 = vor.u32 1.1754944e-38, %v766
    %v768 = vsel %vm765, %v767, %v763
    %v769 = vrcp.pop %v725
    %v770 = vmul.f32 %v725, %v769
    %v771 = vsub.f32 1.0, %v770
    %v772 = vmul.f32 %v769, %v771
    %v773 = vadd.f32 %v769, %v772
    %vm774 = vweird.f32 %v725
    %vm775 = vweird.f32 %v769
    %vm776 = vmor %vm774, %vm775
    %v777 = vsel %vm776, %v769, %v773
    %v778 = vand.u32 2147483647, %v725
    %vm779 = vcmp.eq.f32.partialorder %v778, 8.507059e+37
    %v780 = vand.u32 %v725, 2147483648
    %v781 = vor.u32 1.1754944e-38, %v780
    %v782 = vsel %vm779, %v781, %v777
    %v783 = vrcp.pop %v728
    %v784 = vmul.f32 %v728, %v783
    %v785 = vsub.f32 1.0, %v784
    %v786 = vmul.f32 %v783, %v785
    %v787 = vadd.f32 %v783, %v786
    %vm788 = vweird.f32 %v728
    %vm789 = vweird.f32 %v783
    %vm790 = vmor %vm788, %vm789
    %v791 = vsel %vm790, %v783, %v787
    %v792 = vand.u32 2147483647, %v728
    %vm793 = vcmp.eq.f32.partialorder %v792, 8.507059e+37
    %v794 = vand.u32 %v728, 2147483648
    %v795 = vor.u32 1.1754944e-38, %v794
    %v796 = vsel %vm793, %v795, %v791
    %v797 = vrcp.pop %v731
    %v798 = vmul.f32 %v731, %v797
    %v799 = vsub.f32 1.0, %v798
    %v800 = vmul.f32 %v797, %v799
    %v801 = vadd.f32 %v797, %v800
    %vm802 = vweird.f32 %v731
    %vm803 = vweird.f32 %v797
    %vm804 = vmor %vm802, %vm803
    %v805 = vsel %vm804, %v797, %v801
    %v806 = vand.u32 2147483647, %v731
    %vm807 = vcmp.eq.f32.partialorder %v806, 8.507059e+37
    %v808 = vand.u32 %v731, 2147483648
    %v809 = vor.u32 1.1754944e-38, %v808
    %v810 = vsel %vm807, %v809, %v805
    %v811 = vrcp.pop %v734
    %v812 = vmul.f32 %v734, %v811
    %v813 = vsub.f32 1.0, %v812
    %v814 = vmul.f32 %v811, %v813
    %v815 = vadd.f32 %v811, %v814
    %vm816 = vweird.f32 %v734
    %vm817 = vweird.f32 %v811
    %vm818 = vmor %vm816, %vm817
    %v819 = vsel %vm818, %v811, %v815
    %v820 = vand.u32 2147483647, %v734
    %vm821 = vcmp.eq.f32.partialorder %v820, 8.507059e+37
    %v822 = vand.u32 %v734, 2147483648
    %v823 = vor.u32 1.1754944e-38, %v822
    %v824 = vsel %vm821, %v823, %v819
    %v825 = vrcp.pop %v737
    %v826 = vmul.f32 %v737, %v825
    %v827 = vsub.f32 1.0, %v826
    %v828 = vmul.f32 %v825, %v827
    %v829 = vadd.f32 %v825, %v828
    %vm830 = vweird.f32 %v737
    %vm831 = vweird.f32 %v825
    %vm832 = vmor %vm830, %vm831
    %v833 = vsel %vm832, %v825, %v829
    %v834 = vand.u32 2147483647, %v737
    %vm835 = vcmp.eq.f32.partialorder %v834, 8.507059e+37
    %v836 = vand.u32 %v737, 2147483648
    %v837 = vor.u32 1.1754944e-38, %v836
    %v838 = vsel %vm835, %v837, %v833
    %v839 = vrcp.pop %v740
    %v840 = vmul.f32 %v740, %v839
    %v841 = vsub.f32 1.0, %v840
    %v842 = vmul.f32 %v839, %v841
    %v843 = vadd.f32 %v839, %v842
    %vm844 = vweird.f32 %v740
    %vm845 = vweird.f32 %v839
    %vm846 = vmor %vm844, %vm845
    %v847 = vsel %vm846, %v839, %v843
    %v848 = vand.u32 2147483647, %v740
    %vm849 = vcmp.eq.f32.partialorder %v848, 8.507059e+37
    %v850 = vand.u32 %v740, 2147483648
    %v851 = vor.u32 1.1754944e-38, %v850
    %v852 = vsel %vm849, %v851, %v847
    %v853 = vmul.f32 %v702, %v754
    %v854 = vmul.f32 %v704, %v768
    %v855 = vmul.f32 %v706, %v782
    %v856 = vmul.f32 %v708, %v796
    %v857 = vmul.f32 %v710, %v810
    %v858 = vmul.f32 %v712, %v824
    %v859 = vmul.f32 %v714, %v838
    %v860 = vmul.f32 %v716, %v852
    %861 = vrot.lane.b32.xlu0 %v327, 96
    %v862 = vpop.permute.xlu0 %861
    %863 = vrot.lane.b32.xlu0 %v330, 96
    %v864 = vpop.permute.xlu0 %863
    %865 = vrot.lane.b32.xlu0 %v333, 96
    %v866 = vpop.permute.xlu0 %865
    %867 = vrot.lane.b32.xlu0 %v336, 96
    %v868 = vpop.permute.xlu0 %867
    %v874 = vsel %vm183, %v853, 0
    %876 = vmatpush.msra.mxu0 0.0
    %877 = vmatpush.msra.mxu0 0.0
    %878 = vmatpush.msra.mxu0 0.0
    %879 = vmatpush.msra.mxu0 0.0
    %880 = vmatpush.msra.mxu0 0.0
    %881 = vmatpush.msra.mxu0 0.0
    %882 = vmatpush.msra.mxu0 0.0
    %883 = vmatpush.msra.mxu0 0.0
    %884 = vmatpush.msra.mxu0 0.0
    %885 = vmatpush.msra.mxu0 0.0
    %886 = vmatpush.msra.mxu0 0.0
    %887 = vmatpush.msra.mxu0 0.0
    %888 = vmatpush.msra.mxu0 %v868
    %889 = vmatpush.msra.mxu0 %v866
    %890 = vmatpush.msra.mxu0 %v864
    %891 = vmatpush.msra.mxu0 %v862
    %892 = vmatmul.f32.gmra.mxu0 %v874
    %v893 = vpop.f32.mrf.mxu0
    %v894 = vadd.f32 0.0, %v893
    %895 = vdwg.mxu0
    %896 = vrot.lane.b32.xlu0 %v339, 96
    %v897 = vpop.permute.xlu0 %896
    %898 = vrot.lane.b32.xlu0 %v342, 96
    %v899 = vpop.permute.xlu0 %898
    %900 = vrot.lane.b32.xlu0 %v345, 96
    %v901 = vpop.permute.xlu0 %900
    %902 = vrot.lane.b32.xlu0 %v348, 96
    %v903 = vpop.permute.xlu0 %902
    %v909 = vsel %vm183, %v854, 0
    %911 = vmatpush.msra.mxu0 0.0
    %912 = vmatpush.msra.mxu0 0.0
    %913 = vmatpush.msra.mxu0 0.0
    %914 = vmatpush.msra.mxu0 0.0
    %915 = vmatpush.msra.mxu0 0.0
    %916 = vmatpush.msra.mxu0 0.0
    %917 = vmatpush.msra.mxu0 0.0
    %918 = vmatpush.msra.mxu0 0.0
    %919 = vmatpush.msra.mxu0 0.0
    %920 = vmatpush.msra.mxu0 0.0
    %921 = vmatpush.msra.mxu0 0.0
    %922 = vmatpush.msra.mxu0 0.0
    %923 = vmatpush.msra.mxu0 %v903
    %924 = vmatpush.msra.mxu0 %v901
    %925 = vmatpush.msra.mxu0 %v899
    %926 = vmatpush.msra.mxu0 %v897
    %927 = vmatmul.f32.gmra.mxu0 %v909
    %v928 = vpop.f32.mrf.mxu0
    %v929 = vadd.f32 0.0, %v928
    %930 = vdwg.mxu0
    %v931 = vadd.f32 %v853, %v855
    %v932 = vadd.f32 %v854, %v856
    %933 = vrot.lane.b32.xlu0 %v327, 88
    %v934 = vpop.permute.xlu0 %933
    %935 = vrot.lane.b32.xlu0 %v330, 88
    %v936 = vpop.permute.xlu0 %935
    %937 = vrot.lane.b32.xlu0 %v333, 88
    %v938 = vpop.permute.xlu0 %937
    %939 = vrot.lane.b32.xlu0 %v336, 88
    %v940 = vpop.permute.xlu0 %939
    %v946 = vsel %vm183, %v855, 0
    %948 = vmatpush.msra.mxu0 0.0
    %949 = vmatpush.msra.mxu0 0.0
    %950 = vmatpush.msra.mxu0 0.0
    %951 = vmatpush.msra.mxu0 0.0
    %952 = vmatpush.msra.mxu0 0.0
    %953 = vmatpush.msra.mxu0 0.0
    %954 = vmatpush.msra.mxu0 0.0
    %955 = vmatpush.msra.mxu0 0.0
    %956 = vmatpush.msra.mxu0 0.0
    %957 = vmatpush.msra.mxu0 0.0
    %958 = vmatpush.msra.mxu0 0.0
    %959 = vmatpush.msra.mxu0 0.0
    %960 = vmatpush.msra.mxu0 %v940
    %961 = vmatpush.msra.mxu0 %v938
    %962 = vmatpush.msra.mxu0 %v936
    %963 = vmatpush.msra.mxu0 %v934
    %964 = vmatmul.f32.gmra.mxu0 %v946
    %v965 = vpop.f32.mrf.mxu0
    %v966 = vadd.f32 0.0, %v965
    %967 = vdwg.mxu0
    %968 = vrot.lane.b32.xlu0 %v339, 88
    %v969 = vpop.permute.xlu0 %968
    %970 = vrot.lane.b32.xlu0 %v342, 88
    %v971 = vpop.permute.xlu0 %970
    %972 = vrot.lane.b32.xlu0 %v345, 88
    %v973 = vpop.permute.xlu0 %972
    %974 = vrot.lane.b32.xlu0 %v348, 88
    %v975 = vpop.permute.xlu0 %974
    %v981 = vsel %vm183, %v856, 0
    %983 = vmatpush.msra.mxu0 0.0
    %984 = vmatpush.msra.mxu0 0.0
    %985 = vmatpush.msra.mxu0 0.0
    %986 = vmatpush.msra.mxu0 0.0
    %987 = vmatpush.msra.mxu0 0.0
    %988 = vmatpush.msra.mxu0 0.0
    %989 = vmatpush.msra.mxu0 0.0
    %990 = vmatpush.msra.mxu0 0.0
    %991 = vmatpush.msra.mxu0 0.0
    %992 = vmatpush.msra.mxu0 0.0
    %993 = vmatpush.msra.mxu0 0.0
    %994 = vmatpush.msra.mxu0 0.0
    %995 = vmatpush.msra.mxu0 %v975
    %996 = vmatpush.msra.mxu0 %v973
    %997 = vmatpush.msra.mxu0 %v971
    %998 = vmatpush.msra.mxu0 %v969
    %999 = vmatmul.f32.gmra.mxu0 %v981
    %v1000 = vpop.f32.mrf.mxu0
    %v1001 = vadd.f32 0.0, %v1000
    %1002 = vdwg.mxu0
    %v1003 = vadd.f32 %v931, %v857
    %v1004 = vadd.f32 %v932, %v858
    %1005 = vrot.lane.b32.xlu0 %v327, 80
    %v1006 = vpop.permute.xlu0 %1005
    %1007 = vrot.lane.b32.xlu0 %v330, 80
    %v1008 = vpop.permute.xlu0 %1007
    %1009 = vrot.lane.b32.xlu0 %v333, 80
    %v1010 = vpop.permute.xlu0 %1009
    %1011 = vrot.lane.b32.xlu0 %v336, 80
    %v1012 = vpop.permute.xlu0 %1011
    %v1018 = vsel %vm183, %v857, 0
    %1020 = vmatpush.msra.mxu0 0.0
    %1021 = vmatpush.msra.mxu0 0.0
    %1022 = vmatpush.msra.mxu0 0.0
    %1023 = vmatpush.msra.mxu0 0.0
    %1024 = vmatpush.msra.mxu0 0.0
    %1025 = vmatpush.msra.mxu0 0.0
    %1026 = vmatpush.msra.mxu0 0.0
    %1027 = vmatpush.msra.mxu0 0.0
    %1028 = vmatpush.msra.mxu0 0.0
    %1029 = vmatpush.msra.mxu0 0.0
    %1030 = vmatpush.msra.mxu0 0.0
    %1031 = vmatpush.msra.mxu0 0.0
    %1032 = vmatpush.msra.mxu0 %v1012
    %1033 = vmatpush.msra.mxu0 %v1010
    %1034 = vmatpush.msra.mxu0 %v1008
    %1035 = vmatpush.msra.mxu0 %v1006
    %1036 = vmatmul.f32.gmra.mxu0 %v1018
    %v1037 = vpop.f32.mrf.mxu0
    %v1038 = vadd.f32 0.0, %v1037
    %1039 = vdwg.mxu0
    %1040 = vrot.lane.b32.xlu0 %v339, 80
    %v1041 = vpop.permute.xlu0 %1040
    %1042 = vrot.lane.b32.xlu0 %v342, 80
    %v1043 = vpop.permute.xlu0 %1042
    %1044 = vrot.lane.b32.xlu0 %v345, 80
    %v1045 = vpop.permute.xlu0 %1044
    %1046 = vrot.lane.b32.xlu0 %v348, 80
    %v1047 = vpop.permute.xlu0 %1046
    %v1053 = vsel %vm183, %v858, 0
    %1055 = vmatpush.msra.mxu0 0.0
    %1056 = vmatpush.msra.mxu0 0.0
    %1057 = vmatpush.msra.mxu0 0.0
    %1058 = vmatpush.msra.mxu0 0.0
    %1059 = vmatpush.msra.mxu0 0.0
    %1060 = vmatpush.msra.mxu0 0.0
    %1061 = vmatpush.msra.mxu0 0.0
    %1062 = vmatpush.msra.mxu0 0.0
    %1063 = vmatpush.msra.mxu0 0.0
    %1064 = vmatpush.msra.mxu0 0.0
    %1065 = vmatpush.msra.mxu0 0.0
    %1066 = vmatpush.msra.mxu0 0.0
    %1067 = vmatpush.msra.mxu0 %v1047
    %1068 = vmatpush.msra.mxu0 %v1045
    %1069 = vmatpush.msra.mxu0 %v1043
    %1070 = vmatpush.msra.mxu0 %v1041
    %1071 = vmatmul.f32.gmra.mxu0 %v1053
    %v1072 = vpop.f32.mrf.mxu0
    %v1073 = vadd.f32 0.0, %v1072
    %1074 = vdwg.mxu0
    %v1075 = vadd.f32 %v1003, %v859
    %v1076 = vadd.f32 %v1004, %v860
    %1077 = vrot.lane.b32.xlu0 %v327, 72
    %v1078 = vpop.permute.xlu0 %1077
    %1079 = vrot.lane.b32.xlu0 %v330, 72
    %v1080 = vpop.permute.xlu0 %1079
    %1081 = vrot.lane.b32.xlu0 %v333, 72
    %v1082 = vpop.permute.xlu0 %1081
    %1083 = vrot.lane.b32.xlu0 %v336, 72
    %v1084 = vpop.permute.xlu0 %1083
    %v1090 = vsel %vm183, %v859, 0
    %1092 = vmatpush.msra.mxu0 0.0
    %1093 = vmatpush.msra.mxu0 0.0
    %1094 = vmatpush.msra.mxu0 0.0
    %1095 = vmatpush.msra.mxu0 0.0
    %1096 = vmatpush.msra.mxu0 0.0
    %1097 = vmatpush.msra.mxu0 0.0
    %1098 = vmatpush.msra.mxu0 0.0
    %1099 = vmatpush.msra.mxu0 0.0
    %1100 = vmatpush.msra.mxu0 0.0
    %1101 = vmatpush.msra.mxu0 0.0
    %1102 = vmatpush.msra.mxu0 0.0
    %1103 = vmatpush.msra.mxu0 0.0
    %1104 = vmatpush.msra.mxu0 %v1084
    %1105 = vmatpush.msra.mxu0 %v1082
    %1106 = vmatpush.msra.mxu0 %v1080
    %1107 = vmatpush.msra.mxu0 %v1078
    %1108 = vmatmul.f32.gmra.mxu0 %v1090
    %v1109 = vpop.f32.mrf.mxu0
    %v1110 = vadd.f32 0.0, %v1109
    %1111 = vdwg.mxu0
    %1112 = vrot.lane.b32.xlu0 %v339, 72
    %v1113 = vpop.permute.xlu0 %1112
    %1114 = vrot.lane.b32.xlu0 %v342, 72
    %v1115 = vpop.permute.xlu0 %1114
    %1116 = vrot.lane.b32.xlu0 %v345, 72
    %v1117 = vpop.permute.xlu0 %1116
    %1118 = vrot.lane.b32.xlu0 %v348, 72
    %v1119 = vpop.permute.xlu0 %1118
    %v1125 = vsel %vm183, %v860, 0
    %1127 = vmatpush.msra.mxu0 0.0
    %1128 = vmatpush.msra.mxu0 0.0
    %1129 = vmatpush.msra.mxu0 0.0
    %1130 = vmatpush.msra.mxu0 0.0
    %1131 = vmatpush.msra.mxu0 0.0
    %1132 = vmatpush.msra.mxu0 0.0
    %1133 = vmatpush.msra.mxu0 0.0
    %1134 = vmatpush.msra.mxu0 0.0
    %1135 = vmatpush.msra.mxu0 0.0
    %1136 = vmatpush.msra.mxu0 0.0
    %1137 = vmatpush.msra.mxu0 0.0
    %1138 = vmatpush.msra.mxu0 0.0
    %1139 = vmatpush.msra.mxu0 %v1119
    %1140 = vmatpush.msra.mxu0 %v1117
    %1141 = vmatpush.msra.mxu0 %v1115
    %1142 = vmatpush.msra.mxu0 %v1113
    %1143 = vmatmul.f32.gmra.mxu0 %v1125
    %v1144 = vpop.f32.mrf.mxu0
    %v1145 = vadd.f32 0.0, %v1144
    %1146 = vdwg.mxu0
    %v1147 = vmul.f32 %v1075, 0.25
    %v1148 = vmul.f32 %v1076, 0.25
    %1151 = vrot.lane.b32.xlu0 %v966, 8
    %v1152 = vpop.permute.xlu0 %1151
    %1153 = vrot.lane.b32.xlu0 %v1001, 8
    %v1154 = vpop.permute.xlu0 %1153
    %1159 = vrot.lane.b32.xlu0 %v1038, 16
    %v1160 = vpop.permute.xlu0 %1159
    %1161 = vrot.lane.b32.xlu0 %v1073, 16
    %v1162 = vpop.permute.xlu0 %1161
    %1167 = vrot.lane.b32.xlu0 %v1110, 24
    %v1168 = vpop.permute.xlu0 %1167
    %1169 = vrot.lane.b32.xlu0 %v1145, 24
    %v1170 = vpop.permute.xlu0 %1169
    %v1173 = vsel %vm350, %v894, %v1152
    %v1174 = vsel %vm350, %v929, %v1154
    %vm1175 = vcmask 130048
    %v1176 = vsel %vm1175, %v1173, %v1160
    %v1177 = vsel %vm1175, %v1174, %v1162
    %vm1178 = vcmask 195584
    %v1179 = vsel %vm1178, %v1176, %v1168
    %v1180 = vsel %vm1178, %v1177, %v1170
    %v1181 = vld [vmem:[#allocation7] sm:$0xff]
    %v1182 = vld [vmem:[#allocation7 + $0x8] sm:$0xff]
    %v1183 = vld [vmem:[#allocation7 + $0x10] sm:$0xff]
    %v1184 = vld [vmem:[#allocation7 + $0x18] sm:$0xff]
    %v1185 = vld [vmem:[%s8] sm:$0x1]
    %v1187 = vperm.slane %v1185, 0
    %v1190 = vsel %vm183, %v1179, 0
    %v1193 = vsel %vm183, %v1180, 0
    %1195 = vmatpush.msra.mxu0 0.0
    %1196 = vmatpush.msra.mxu0 0.0
    %1197 = vmatpush.msra.mxu0 0.0
    %1198 = vmatpush.msra.mxu0 0.0
    %1199 = vmatpush.msra.mxu0 0.0
    %1200 = vmatpush.msra.mxu0 0.0
    %1201 = vmatpush.msra.mxu0 0.0
    %1202 = vmatpush.msra.mxu0 0.0
    %1203 = vmatpush.msra.mxu0 0.0
    %1204 = vmatpush.msra.mxu0 0.0
    %1205 = vmatpush.msra.mxu0 0.0
    %1206 = vmatpush.msra.mxu0 0.0
    %1207 = vmatpush.msra.mxu0 %v1184
    %1208 = vmatpush.msra.mxu0 %v1183
    %1209 = vmatpush.msra.mxu0 %v1182
    %1210 = vmatpush.msra.mxu0 %v1181
    %1211 = vmatmul.f32.gmra.mxu0 %v1190
    %v1212 = vpop.f32.mrf.mxu0
    %v1213 = vadd.f32 %v1187, %v1212
    %1214 = vmatmul.f32.gmra.mxu0 %v1193
    %v1215 = vpop.f32.mrf.mxu0
    %v1216 = vadd.f32 %v1187, %v1215
    %1217 = vdwg.mxu0
    %1220 = vrot.lane.b32.xlu0 %v1147, 32
    %v1221 = vpop.permute.xlu0 %1220
    %1222 = vrot.lane.b32.xlu0 %v1148, 32
    %v1223 = vpop.permute.xlu0 %1222
    %v1226 = vsel %vm183, %v1213, %v1221
    %v1227 = vsel %vm183, %v1216, %v1223
    %vm1228 = vcmask 523264
    %v1229 = vsel %vm1228, %v1226, 0.0
    %v1230 = vsel %vm1228, %v1227, 0.0
    %1231 = vst [vmem:[#allocation8] sm:$0xff] %v1229
    %1232 = vst [vmem:[#allocation8 + $0x8] sm:$0xff] %v1230
    // Predicated region
    $region50: #{tpu_custom_call.1} parent=1 // pred_check
      _
    $region51: #{tpu_custom_call.1} parent=1 // pred_check_branch
      %1234 = sbr.rel (0) target = $region53
    $region52: #{tpu_custom_call.1} parent=1 // pred_region
      %1236 = vsyncadd [#allocation4], 0
      %s1237 = sshll.u32 [#allocation8], 4
      %s1238 = int_to_ptr.vmem [resolvable:$true] %s1237
      %s1239 = sshll.u32 %s9, 4
      %s1240 = int_to_ptr.hbm [resolvable:$true] %s1239
      %1245 = dma.vmem_to_hbm [thread:$0]  %s1238, 256, %s1240, [#allocation4], 128, 128, 8
    $region53: #{tpu_custom_call.1} parent=1 // pred_fallthru
      _
    // Predicated region
    $region54: #{tpu_custom_call.1} parent=1 // pred_check
      _
    $region55: #{tpu_custom_call.1} parent=1 // pred_check_branch
      %1247 = sbr.rel (0) target = $region57
    $region56: #{tpu_custom_call.1} parent=1 // pred_region
      %1249 = dma.done [#allocation4], 256
    $region57: #{tpu_custom_call.1} parent=1 // pred_fallthru
      _
    %1250 = vsyncpa [#allocation3], 1
    %1251 = vsyncpa [#allocation6], 1
    %1252 = vsyncpa [#allocation4], 1

</llo_original>
